<compile_context>
chip_gen: v6e
topology: v6e:2x2x1
jax: 0.10.0
libtpu: 0.0.40
codegen_flags: <defaults>
</compile_context>

<pallas_src>
import functools

import jax
import jax.numpy as jnp
from jax.experimental import pallas as pl
from jax.experimental.pallas import tpu as pltpu

INPUT_SIZE = 28                      # autoencoder_config.input_size
IN_DIM = INPUT_SIZE * INPUT_SIZE     # 784
ENC_DIMS = [IN_DIM, 128, 64, 12, 3]
DEC_DIMS = [3, 12, 64, 128, IN_DIM]
LAYER_DIMS = list(zip(ENC_DIMS[:-1], ENC_DIMS[1:])) + list(zip(DEC_DIMS[:-1], DEC_DIMS[1:]))

MAX_TM = 1024                        # rows per batch tile (multiple of 16)
VMEM_LIMIT_BYTES = 32 * 1024 * 1024  # raise v5e's 16 MiB scoped default; <= physical everywhere


def _round_up(x, m):
    return ((x + m - 1) // m) * m


def _cdiv(a, b):
    return (a + b - 1) // b


def _choose_tile(batch, max_tm):
    """Pick (tile, padded_batch).

    tile is a multiple of 16 (bf16 sublane-packed output tiles), capped at max_tm,
    targets >=2 grid steps (so the 'parallel' batch axis can shard across both v7x
    TensorCores), and prefers a tile that divides the rounded batch so no padding /
    output slicing is needed."""
    g = 16
    b_r = _round_up(batch, g)
    target = min(max_tm, max(g, _round_up(_cdiv(b_r, 2), g)))
    t = target
    while t >= max(g, target // 2):
        if b_r % t == 0:
            return t, b_r
        t -= g
    return target, _round_up(b_r, target)


def _supports_bf16_eup():
    """bf16 transcendentals pay off on v6e/v7x; v5e (and older) have no bf16 EUP/VPU."""
    try:
        kind = jax.devices()[0].device_kind.lower()
    except Exception:
        return True
    return not any(v in kind for v in ("v2", "v3", "v4", "v5"))


def _autoencoder_kernel(x_ref,
                        w1, b1, w2, b2, w3, b3, w4, b4,     # encoder params
                        w5, b5, w6, b6, w7, b7, w8, b8,     # decoder params
                        enc_ref, dec_ref, *, act_dtype):
    def dense(h, w, b):
        # bf16 MXU matmul with f32 accumulation; bias-add in f32 on the VPU.
        return jnp.dot(h.astype(jnp.bfloat16), w[...],
                       preferred_element_type=jnp.float32) + b[...]

    h = x_ref[...]                                   # (TM, 784) streamed f32; cast inside dense

    # ---- encoder: (Linear, Tanh) x3, then final Linear (no activation) ----
    h = jnp.tanh(dense(h, w1, b1).astype(act_dtype))
    h = jnp.tanh(dense(h, w2, b2).astype(act_dtype))
    h = jnp.tanh(dense(h, w3, b3).astype(act_dtype))
    enc = dense(h, w4, b4)                           # (TM, 3) f32
    enc_ref[...] = enc.astype(enc_ref.dtype)

    # ---- decoder: (Linear, Tanh) x3, then Linear + Sigmoid ----
    d = jnp.tanh(dense(enc, w5, b5).astype(act_dtype))
    d = jnp.tanh(dense(d, w6, b6).astype(act_dtype))
    d = jnp.tanh(dense(d, w7, b7).astype(act_dtype))
    logits = dense(d, w8, b8).astype(act_dtype)      # (TM, 784)
    # sigmoid(x) == 0.5*(tanh(0.5*x)+1): EUP-friendly, no divide, no inf intermediate.
    dec_ref[...] = (0.5 * (jnp.tanh(0.5 * logits) + 1.0)).astype(dec_ref.dtype)


def autoencoder_forward(x, params, *, max_tm=MAX_TM, bf16_act=None):
    """x: (B, 784) float32. params: flat [w1,b1,...,w8,b8], w_i (in,out) bf16, b_i (1,out) f32.

    Returns (encoded (B,3) f32, decoded (B,784) bf16)."""
    B, F = x.shape
    assert F == IN_DIM
    if bf16_act is None:
        bf16_act = _supports_bf16_eup()
    act_dtype = jnp.bfloat16 if bf16_act else jnp.float32

    tile, Bp = _choose_tile(B, max_tm)
    if Bp != B:                       # only for ragged batches; common sizes avoid this copy
        x = jnp.pad(x, ((0, Bp - B), (0, 0)))
    grid = (Bp // tile,)

    def act_spec(cols):
        return pl.BlockSpec((tile, cols), lambda i: (i, 0), memory_space=pltpu.VMEM)

    def resident_spec(shape):
        # Constant block index -> fetched once, VMEM-resident across all grid steps.
        return pl.BlockSpec(shape, lambda i: (0, 0), memory_space=pltpu.VMEM)

    in_specs = [act_spec(IN_DIM)] + [resident_spec(p.shape) for p in params]
    out_specs = (act_spec(3), act_spec(IN_DIM))

    # Advisory cost estimate for XLA's scheduler.
    flops_per_row = 2 * sum(a * b for a, b in LAYER_DIMS)
    trans_per_row = 128 + 64 + 12 + 12 + 64 + 128 + IN_DIM   # tanh/sigmoid elements
    weight_bytes = sum(int(p.size) * p.dtype.itemsize for p in params)
    cost = pl.CostEstimate(
        flops=flops_per_row * Bp,
        transcendentals=trans_per_row * Bp,
        bytes_accessed=(Bp * IN_DIM * x.dtype.itemsize    # streamed input
                        + Bp * IN_DIM * 2                 # bf16 decoded writeback
                        + Bp * 3 * 4                      # f32 encoded writeback
                        + weight_bytes))

    kernel = functools.partial(_autoencoder_kernel, act_dtype=act_dtype)
    enc, dec = pl.pallas_call(
        kernel,
        out_shape=(jax.ShapeDtypeStruct((Bp, 3), jnp.float32),
                   jax.ShapeDtypeStruct((Bp, IN_DIM), jnp.bfloat16)),
        grid=grid,
        in_specs=in_specs,
        out_specs=out_specs,
        compiler_params=pltpu.CompilerParams(
            dimension_semantics=("parallel",),
            vmem_limit_bytes=VMEM_LIMIT_BYTES),
        cost_estimate=cost,
    )(x, *params)

    if Bp != B:
        enc, dec = enc[:B], dec[:B]
    return enc, dec


def make_params(key):
    """Deterministic init mimicking PyTorch Linear default (uniform +-1/sqrt(fan_in)).

    Weights are stored (in, out) in bf16 (MXU-native); biases (1, out) in f32."""
    params = []
    for (fan_in, fan_out) in LAYER_DIMS:
        key, kw, kb = jax.random.split(key, 3)
        bound = 1.0 / jnp.sqrt(fan_in)
        w = jax.random.uniform(kw, (fan_in, fan_out), jnp.float32, -bound, bound)
        b = jax.random.uniform(kb, (1, fan_out), jnp.float32, -bound, bound)
        params += [w.astype(jnp.bfloat16), b]
    return params


def reference_forward(x, params, *, bf16_act):
    """Pure-JAX reference mirroring the kernel numerics (bf16 weights / matmul inputs,
    f32 accumulation, same activation dtype, bf16 decoded output)."""
    (w1, b1, w2, b2, w3, b3, w4, b4,
     w5, b5, w6, b6, w7, b7, w8, b8) = params
    act_dtype = jnp.bfloat16 if bf16_act else jnp.float32

    def dense(h, w, b):
        return jnp.dot(h.astype(jnp.bfloat16), w,
                       preferred_element_type=jnp.float32) + b

    h = x
    h = jnp.tanh(dense(h, w1, b1).astype(act_dtype))
    h = jnp.tanh(dense(h, w2, b2).astype(act_dtype))
    h = jnp.tanh(dense(h, w3, b3).astype(act_dtype))
    enc = dense(h, w4, b4)
    d = jnp.tanh(dense(enc, w5, b5).astype(act_dtype))
    d = jnp.tanh(dense(d, w6, b6).astype(act_dtype))
    d = jnp.tanh(dense(d, w7, b7).astype(act_dtype))
    logits = dense(d, w8, b8).astype(act_dtype)
    dec = 0.5 * (jnp.tanh(0.5 * logits) + 1.0)
    return enc, dec.astype(jnp.bfloat16)


if __name__ == "__main__":
    key = jax.random.PRNGKey(0)
    kx, kp = jax.random.split(key)

    B = 64                                                  # autoencoder_config.batch_size
    x = jax.random.uniform(kx, (B, IN_DIM), jnp.float32)    # MNIST-like pixels in [0,1)
    params = make_params(kp)

    bf16_act = _supports_bf16_eup()
    enc, dec = autoencoder_forward(x, params, bf16_act=bf16_act)
    jax.block_until_ready((enc, dec))

    enc_ref, dec_ref = reference_forward(x, params, bf16_act=bf16_act)
    assert enc.shape == (B, 3) and enc.dtype == jnp.float32
    assert dec.shape == (B, IN_DIM) and dec.dtype == jnp.bfloat16
    # enc is f32; dec is bf16 (spacing ~4e-3 near 1.0), so tolerances account for that.
    assert jnp.allclose(enc, enc_ref, atol=5e-3, rtol=5e-3)
    assert jnp.allclose(dec.astype(jnp.float32), dec_ref.astype(jnp.float32),
                        atol=2e-2, rtol=2e-2)

    print("KERNEL_OK")
</pallas_src>

<mosaic_0001>
module attributes {stable_mosaic.version = 11 : i64} {
  func.func @_autoencoder_kernel(%arg0: i32, %arg1: memref<32x784xf32, #tpu.memory_space<vmem>>, %arg2: memref<784x128xbf16, #tpu.memory_space<vmem>>, %arg3: memref<1x128xf32, #tpu.memory_space<vmem>>, %arg4: memref<128x64xbf16, #tpu.memory_space<vmem>>, %arg5: memref<1x64xf32, #tpu.memory_space<vmem>>, %arg6: memref<64x12xbf16, #tpu.memory_space<vmem>>, %arg7: memref<1x12xf32, #tpu.memory_space<vmem>>, %arg8: memref<12x3xbf16, #tpu.memory_space<vmem>>, %arg9: memref<1x3xf32, #tpu.memory_space<vmem>>, %arg10: memref<3x12xbf16, #tpu.memory_space<vmem>>, %arg11: memref<1x12xf32, #tpu.memory_space<vmem>>, %arg12: memref<12x64xbf16, #tpu.memory_space<vmem>>, %arg13: memref<1x64xf32, #tpu.memory_space<vmem>>, %arg14: memref<64x128xbf16, #tpu.memory_space<vmem>>, %arg15: memref<1x128xf32, #tpu.memory_space<vmem>>, %arg16: memref<128x784xbf16, #tpu.memory_space<vmem>>, %arg17: memref<1x784xf32, #tpu.memory_space<vmem>>, %arg18: memref<32x3xf32, #tpu.memory_space<vmem>>, %arg19: memref<32x784xbf16, #tpu.memory_space<vmem>>) attributes {dimension_semantics = [#tpu.dimension_semantics<parallel>], iteration_bounds = array<i64: 2>, scalar_prefetch = 0 : i64, scratch_operands = 0 : i64, tpu.core_type = #tpu.core_type<tc>, window_params = [{transform_indices = @transform_0, window_bounds = array<i64: 32, 784>}, {pipeline_mode = #tpu.pipeline_mode<synchronous>, transform_indices = @transform_1, window_bounds = array<i64: 784, 128>}, {pipeline_mode = #tpu.pipeline_mode<synchronous>, transform_indices = @transform_2, window_bounds = array<i64: 1, 128>}, {pipeline_mode = #tpu.pipeline_mode<synchronous>, transform_indices = @transform_3, window_bounds = array<i64: 128, 64>}, {pipeline_mode = #tpu.pipeline_mode<synchronous>, transform_indices = @transform_4, window_bounds = array<i64: 1, 64>}, {pipeline_mode = #tpu.pipeline_mode<synchronous>, transform_indices = @transform_5, window_bounds = array<i64: 64, 12>}, {pipeline_mode = #tpu.pipeline_mode<synchronous>, transform_indices = @transform_6, window_bounds = array<i64: 1, 12>}, {pipeline_mode = #tpu.pipeline_mode<synchronous>, transform_indices = @transform_7, window_bounds = array<i64: 12, 3>}, {pipeline_mode = #tpu.pipeline_mode<synchronous>, transform_indices = @transform_8, window_bounds = array<i64: 1, 3>}, {pipeline_mode = #tpu.pipeline_mode<synchronous>, transform_indices = @transform_9, window_bounds = array<i64: 3, 12>}, {pipeline_mode = #tpu.pipeline_mode<synchronous>, transform_indices = @transform_10, window_bounds = array<i64: 1, 12>}, {pipeline_mode = #tpu.pipeline_mode<synchronous>, transform_indices = @transform_11, window_bounds = array<i64: 12, 64>}, {pipeline_mode = #tpu.pipeline_mode<synchronous>, transform_indices = @transform_12, window_bounds = array<i64: 1, 64>}, {pipeline_mode = #tpu.pipeline_mode<synchronous>, transform_indices = @transform_13, window_bounds = array<i64: 64, 128>}, {pipeline_mode = #tpu.pipeline_mode<synchronous>, transform_indices = @transform_14, window_bounds = array<i64: 1, 128>}, {pipeline_mode = #tpu.pipeline_mode<synchronous>, transform_indices = @transform_15, window_bounds = array<i64: 128, 784>}, {pipeline_mode = #tpu.pipeline_mode<synchronous>, transform_indices = @transform_16, window_bounds = array<i64: 1, 784>}, {transform_indices = @transform_17, window_bounds = array<i64: 32, 3>}, {transform_indices = @transform_18, window_bounds = array<i64: 32, 784>}]} {
    %c0 = arith.constant 0 : index
    %c0_0 = arith.constant 0 : index
    %0 = vector.load %arg1[%c0, %c0_0] : memref<32x784xf32, #tpu.memory_space<vmem>>, vector<32x784xf32>
    %1 = arith.truncf %0 : vector<32x784xf32> to vector<32x784xbf16>
    %c0_1 = arith.constant 0 : index
    %c0_2 = arith.constant 0 : index
    %2 = vector.load %arg2[%c0_1, %c0_2] : memref<784x128xbf16, #tpu.memory_space<vmem>>, vector<784x128xbf16>
    %cst = arith.constant dense<0.000000e+00> : vector<32x128xf32>
    %3 = tpu.matmul %1, %2, %cst {dimension_numbers = #tpu.dot_dimension_numbers<[1], [0], [0], [1], [0, 0, 1, 1], [], []>} : vector<32x784xbf16>, vector<784x128xbf16>, vector<32x128xf32> -> vector<32x128xf32>
    %c0_3 = arith.constant 0 : index
    %c0_4 = arith.constant 0 : index
    %4 = vector.load %arg3[%c0_3, %c0_4] : memref<1x128xf32, #tpu.memory_space<vmem>>, vector<1x128xf32>
    %5 = vector.broadcast %4 : vector<1x128xf32> to vector<32x128xf32>
    %6 = arith.addf %3, %5 : vector<32x128xf32>
    %7 = arith.truncf %6 : vector<32x128xf32> to vector<32x128xbf16>
    %8 = math.tanh %7 : vector<32x128xbf16>
    %c0_5 = arith.constant 0 : index
    %c0_6 = arith.constant 0 : index
    %9 = vector.load %arg4[%c0_5, %c0_6] : memref<128x64xbf16, #tpu.memory_space<vmem>>, vector<128x64xbf16>
    %cst_7 = arith.constant dense<0.000000e+00> : vector<32x64xf32>
    %10 = tpu.matmul %8, %9, %cst_7 {dimension_numbers = #tpu.dot_dimension_numbers<[1], [0], [0], [1], [0, 0, 1, 1], [], []>} : vector<32x128xbf16>, vector<128x64xbf16>, vector<32x64xf32> -> vector<32x64xf32>
    %c0_8 = arith.constant 0 : index
    %c0_9 = arith.constant 0 : index
    %11 = vector.load %arg5[%c0_8, %c0_9] : memref<1x64xf32, #tpu.memory_space<vmem>>, vector<1x64xf32>
    %12 = vector.broadcast %11 : vector<1x64xf32> to vector<32x64xf32>
    %13 = arith.addf %10, %12 : vector<32x64xf32>
    %14 = arith.truncf %13 : vector<32x64xf32> to vector<32x64xbf16>
    %15 = math.tanh %14 : vector<32x64xbf16>
    %c0_10 = arith.constant 0 : index
    %c0_11 = arith.constant 0 : index
    %16 = vector.load %arg6[%c0_10, %c0_11] : memref<64x12xbf16, #tpu.memory_space<vmem>>, vector<64x12xbf16>
    %cst_12 = arith.constant dense<0.000000e+00> : vector<32x12xf32>
    %17 = tpu.matmul %15, %16, %cst_12 {dimension_numbers = #tpu.dot_dimension_numbers<[1], [0], [0], [1], [0, 0, 1, 1], [], []>} : vector<32x64xbf16>, vector<64x12xbf16>, vector<32x12xf32> -> vector<32x12xf32>
    %c0_13 = arith.constant 0 : index
    %c0_14 = arith.constant 0 : index
    %18 = vector.load %arg7[%c0_13, %c0_14] : memref<1x12xf32, #tpu.memory_space<vmem>>, vector<1x12xf32>
    %19 = vector.broadcast %18 : vector<1x12xf32> to vector<32x12xf32>
    %20 = arith.addf %17, %19 : vector<32x12xf32>
    %21 = arith.truncf %20 : vector<32x12xf32> to vector<32x12xbf16>
    %22 = math.tanh %21 : vector<32x12xbf16>
    %c0_15 = arith.constant 0 : index
    %c0_16 = arith.constant 0 : index
    %23 = vector.load %arg8[%c0_15, %c0_16] : memref<12x3xbf16, #tpu.memory_space<vmem>>, vector<12x3xbf16>
    %cst_17 = arith.constant dense<0.000000e+00> : vector<32x3xf32>
    %24 = tpu.matmul %22, %23, %cst_17 {dimension_numbers = #tpu.dot_dimension_numbers<[1], [0], [0], [1], [0, 0, 1, 1], [], []>} : vector<32x12xbf16>, vector<12x3xbf16>, vector<32x3xf32> -> vector<32x3xf32>
    %c0_18 = arith.constant 0 : index
    %c0_19 = arith.constant 0 : index
    %25 = vector.load %arg9[%c0_18, %c0_19] : memref<1x3xf32, #tpu.memory_space<vmem>>, vector<1x3xf32>
    %26 = vector.broadcast %25 : vector<1x3xf32> to vector<32x3xf32>
    %27 = arith.addf %24, %26 : vector<32x3xf32>
    %c0_20 = arith.constant 0 : index
    %c0_21 = arith.constant 0 : index
    %28 = vector.load %arg18[%c0_20, %c0_21] : memref<32x3xf32, #tpu.memory_space<vmem>>, vector<32x3xf32>
    tpu.vector_store %arg18[%c0_20, %c0_21], %27 {strides = array<i32>} : memref<32x3xf32, #tpu.memory_space<vmem>>, vector<32x3xf32>,
    %29 = arith.truncf %27 : vector<32x3xf32> to vector<32x3xbf16>
    %c0_22 = arith.constant 0 : index
    %c0_23 = arith.constant 0 : index
    %30 = vector.load %arg10[%c0_22, %c0_23] : memref<3x12xbf16, #tpu.memory_space<vmem>>, vector<3x12xbf16>
    %cst_24 = arith.constant dense<0.000000e+00> : vector<32x12xf32>
    %31 = tpu.matmul %29, %30, %cst_24 {dimension_numbers = #tpu.dot_dimension_numbers<[1], [0], [0], [1], [0, 0, 1, 1], [], []>} : vector<32x3xbf16>, vector<3x12xbf16>, vector<32x12xf32> -> vector<32x12xf32>
    %c0_25 = arith.constant 0 : index
    %c0_26 = arith.constant 0 : index
    %32 = vector.load %arg11[%c0_25, %c0_26] : memref<1x12xf32, #tpu.memory_space<vmem>>, vector<1x12xf32>
    %33 = vector.broadcast %32 : vector<1x12xf32> to vector<32x12xf32>
    %34 = arith.addf %31, %33 : vector<32x12xf32>
    %35 = arith.truncf %34 : vector<32x12xf32> to vector<32x12xbf16>
    %36 = math.tanh %35 : vector<32x12xbf16>
    %c0_27 = arith.constant 0 : index
    %c0_28 = arith.constant 0 : index
    %37 = vector.load %arg12[%c0_27, %c0_28] : memref<12x64xbf16, #tpu.memory_space<vmem>>, vector<12x64xbf16>
    %cst_29 = arith.constant dense<0.000000e+00> : vector<32x64xf32>
    %38 = tpu.matmul %36, %37, %cst_29 {dimension_numbers = #tpu.dot_dimension_numbers<[1], [0], [0], [1], [0, 0, 1, 1], [], []>} : vector<32x12xbf16>, vector<12x64xbf16>, vector<32x64xf32> -> vector<32x64xf32>
    %c0_30 = arith.constant 0 : index
    %c0_31 = arith.constant 0 : index
    %39 = vector.load %arg13[%c0_30, %c0_31] : memref<1x64xf32, #tpu.memory_space<vmem>>, vector<1x64xf32>
    %40 = vector.broadcast %39 : vector<1x64xf32> to vector<32x64xf32>
    %41 = arith.addf %38, %40 : vector<32x64xf32>
    %42 = arith.truncf %41 : vector<32x64xf32> to vector<32x64xbf16>
    %43 = math.tanh %42 : vector<32x64xbf16>
    %c0_32 = arith.constant 0 : index
    %c0_33 = arith.constant 0 : index
    %44 = vector.load %arg14[%c0_32, %c0_33] : memref<64x128xbf16, #tpu.memory_space<vmem>>, vector<64x128xbf16>
    %cst_34 = arith.constant dense<0.000000e+00> : vector<32x128xf32>
    %45 = tpu.matmul %43, %44, %cst_34 {dimension_numbers = #tpu.dot_dimension_numbers<[1], [0], [0], [1], [0, 0, 1, 1], [], []>} : vector<32x64xbf16>, vector<64x128xbf16>, vector<32x128xf32> -> vector<32x128xf32>
    %c0_35 = arith.constant 0 : index
    %c0_36 = arith.constant 0 : index
    %46 = vector.load %arg15[%c0_35, %c0_36] : memref<1x128xf32, #tpu.memory_space<vmem>>, vector<1x128xf32>
    %47 = vector.broadcast %46 : vector<1x128xf32> to vector<32x128xf32>
    %48 = arith.addf %45, %47 : vector<32x128xf32>
    %49 = arith.truncf %48 : vector<32x128xf32> to vector<32x128xbf16>
    %50 = math.tanh %49 : vector<32x128xbf16>
    %c0_37 = arith.constant 0 : index
    %c0_38 = arith.constant 0 : index
    %51 = vector.load %arg16[%c0_37, %c0_38] : memref<128x784xbf16, #tpu.memory_space<vmem>>, vector<128x784xbf16>
    %cst_39 = arith.constant dense<0.000000e+00> : vector<32x784xf32>
    %52 = tpu.matmul %50, %51, %cst_39 {dimension_numbers = #tpu.dot_dimension_numbers<[1], [0], [0], [1], [0, 0, 1, 1], [], []>} : vector<32x128xbf16>, vector<128x784xbf16>, vector<32x784xf32> -> vector<32x784xf32>
    %c0_40 = arith.constant 0 : index
    %c0_41 = arith.constant 0 : index
    %53 = vector.load %arg17[%c0_40, %c0_41] : memref<1x784xf32, #tpu.memory_space<vmem>>, vector<1x784xf32>
    %54 = vector.broadcast %53 : vector<1x784xf32> to vector<32x784xf32>
    %55 = arith.addf %52, %54 : vector<32x784xf32>
    %56 = arith.truncf %55 : vector<32x784xf32> to vector<32x784xbf16>
    %cst_42 = arith.constant 5.000000e-01 : bf16
    %57 = vector.broadcast %cst_42 : bf16 to vector<32x784xbf16>
    %58 = arith.mulf %57, %56 : vector<32x784xbf16>
    %59 = math.tanh %58 : vector<32x784xbf16>
    %cst_43 = arith.constant 1.000000e+00 : bf16
    %60 = vector.broadcast %cst_43 : bf16 to vector<32x784xbf16>
    %61 = arith.addf %59, %60 : vector<32x784xbf16>
    %cst_44 = arith.constant 5.000000e-01 : bf16
    %62 = vector.broadcast %cst_44 : bf16 to vector<32x784xbf16>
    %63 = arith.mulf %62, %61 : vector<32x784xbf16>
    %c0_45 = arith.constant 0 : index
    %c0_46 = arith.constant 0 : index
    %64 = vector.load %arg19[%c0_45, %c0_46] : memref<32x784xbf16, #tpu.memory_space<vmem>>, vector<32x784xbf16>
    tpu.vector_store %arg19[%c0_45, %c0_46], %63 {strides = array<i32>} : memref<32x784xbf16, #tpu.memory_space<vmem>>, vector<32x784xbf16>,
    return
  }
  func.func @transform_0(%arg0: i32) -> (i32, i32) {
    %c0_i32 = arith.constant 0 : i32
    %c0_i32_0 = arith.constant 0 : i32
    return %arg0, %c0_i32 : i32, i32
  }
  func.func @transform_1(%arg0: i32) -> (i32, i32) {
    %c0_i32 = arith.constant 0 : i32
    %c0_i32_0 = arith.constant 0 : i32
    %c0_i32_1 = arith.constant 0 : i32
    return %c0_i32, %c0_i32_0 : i32, i32
  }
  func.func @transform_2(%arg0: i32) -> (i32, i32) {
    %c0_i32 = arith.constant 0 : i32
    %c0_i32_0 = arith.constant 0 : i32
    %c0_i32_1 = arith.constant 0 : i32
    return %c0_i32, %c0_i32_0 : i32, i32
  }
  func.func @transform_3(%arg0: i32) -> (i32, i32) {
    %c0_i32 = arith.constant 0 : i32
    %c0_i32_0 = arith.constant 0 : i32
    %c0_i32_1 = arith.constant 0 : i32
    return %c0_i32, %c0_i32_0 : i32, i32
  }
  func.func @transform_4(%arg0: i32) -> (i32, i32) {
    %c0_i32 = arith.constant 0 : i32
    %c0_i32_0 = arith.constant 0 : i32
    %c0_i32_1 = arith.constant 0 : i32
    return %c0_i32, %c0_i32_0 : i32, i32
  }
  func.func @transform_5(%arg0: i32) -> (i32, i32) {
    %c0_i32 = arith.constant 0 : i32
    %c0_i32_0 = arith.constant 0 : i32
    %c0_i32_1 = arith.constant 0 : i32
    return %c0_i32, %c0_i32_0 : i32, i32
  }
  func.func @transform_6(%arg0: i32) -> (i32, i32) {
    %c0_i32 = arith.constant 0 : i32
    %c0_i32_0 = arith.constant 0 : i32
    %c0_i32_1 = arith.constant 0 : i32
    return %c0_i32, %c0_i32_0 : i32, i32
  }
  func.func @transform_7(%arg0: i32) -> (i32, i32) {
    %c0_i32 = arith.constant 0 : i32
    %c0_i32_0 = arith.constant 0 : i32
    %c0_i32_1 = arith.constant 0 : i32
    return %c0_i32, %c0_i32_0 : i32, i32
  }
  func.func @transform_8(%arg0: i32) -> (i32, i32) {
    %c0_i32 = arith.constant 0 : i32
    %c0_i32_0 = arith.constant 0 : i32
    %c0_i32_1 = arith.constant 0 : i32
    return %c0_i32, %c0_i32_0 : i32, i32
  }
  func.func @transform_9(%arg0: i32) -> (i32, i32) {
    %c0_i32 = arith.constant 0 : i32
    %c0_i32_0 = arith.constant 0 : i32
    %c0_i32_1 = arith.constant 0 : i32
    return %c0_i32, %c0_i32_0 : i32, i32
  }
  func.func @transform_10(%arg0: i32) -> (i32, i32) {
    %c0_i32 = arith.constant 0 : i32
    %c0_i32_0 = arith.constant 0 : i32
    %c0_i32_1 = arith.constant 0 : i32
    return %c0_i32, %c0_i32_0 : i32, i32
  }
  func.func @transform_11(%arg0: i32) -> (i32, i32) {
    %c0_i32 = arith.constant 0 : i32
    %c0_i32_0 = arith.constant 0 : i32
    %c0_i32_1 = arith.constant 0 : i32
    return %c0_i32, %c0_i32_0 : i32, i32
  }
  func.func @transform_12(%arg0: i32) -> (i32, i32) {
    %c0_i32 = arith.constant 0 : i32
    %c0_i32_0 = arith.constant 0 : i32
    %c0_i32_1 = arith.constant 0 : i32
    return %c0_i32, %c0_i32_0 : i32, i32
  }
  func.func @transform_13(%arg0: i32) -> (i32, i32) {
    %c0_i32 = arith.constant 0 : i32
    %c0_i32_0 = arith.constant 0 : i32
    %c0_i32_1 = arith.constant 0 : i32
    return %c0_i32, %c0_i32_0 : i32, i32
  }
  func.func @transform_14(%arg0: i32) -> (i32, i32) {
    %c0_i32 = arith.constant 0 : i32
    %c0_i32_0 = arith.constant 0 : i32
    %c0_i32_1 = arith.constant 0 : i32
    return %c0_i32, %c0_i32_0 : i32, i32
  }
  func.func @transform_15(%arg0: i32) -> (i32, i32) {
    %c0_i32 = arith.constant 0 : i32
    %c0_i32_0 = arith.constant 0 : i32
    %c0_i32_1 = arith.constant 0 : i32
    return %c0_i32, %c0_i32_0 : i32, i32
  }
  func.func @transform_16(%arg0: i32) -> (i32, i32) {
    %c0_i32 = arith.constant 0 : i32
    %c0_i32_0 = arith.constant 0 : i32
    %c0_i32_1 = arith.constant 0 : i32
    return %c0_i32, %c0_i32_0 : i32, i32
  }
  func.func @transform_17(%arg0: i32) -> (i32, i32) {
    %c0_i32 = arith.constant 0 : i32
    %c0_i32_0 = arith.constant 0 : i32
    return %arg0, %c0_i32 : i32, i32
  }
  func.func @transform_18(%arg0: i32) -> (i32, i32) {
    %c0_i32 = arith.constant 0 : i32
    %c0_i32_0 = arith.constant 0 : i32
    return %arg0, %c0_i32 : i32, i32
  }
}

</mosaic_0001>

<llo_original>
// kernel: tpu_custom_call.1
$region0: #{tpu_custom_call.1}
  #allocation0 [shape = 'u32[]', space=smem, size = 0x4, offset = 0x4, fixed_abs, tag = 'smem constant byte address 0x4 - core index']
  #allocation1 [shape = 'u32[144,128]{1,0:T(1,128)}', space=vmem, size = 0x12000, scoped, tag = 'internal scratch']
  %s0 = inlined_call_operand.vmem [shape: f32[64,784], index: 0, kind: input, shape index: {}]
  %s1 = inlined_call_operand.vmem [shape: bf16[784,128], index: 1, kind: input, shape index: {}]
  %s2 = inlined_call_operand.vmem [shape: f32[1,128], index: 2, kind: input, shape index: {}]
  %s3 = inlined_call_operand.vmem [shape: bf16[128,64], index: 3, kind: input, shape index: {}]
  %s4 = inlined_call_operand.vmem [shape: f32[1,64], index: 4, kind: input, shape index: {}]
  %s5 = inlined_call_operand.vmem [shape: bf16[64,12], index: 5, kind: input, shape index: {}]
  %s6 = inlined_call_operand.vmem [shape: f32[1,12], index: 6, kind: input, shape index: {}]
  %s7 = inlined_call_operand.vmem [shape: bf16[12,3], index: 7, kind: input, shape index: {}]
  %s8 = inlined_call_operand.vmem [shape: f32[1,3], index: 8, kind: input, shape index: {}]
  %s9 = inlined_call_operand.vmem [shape: bf16[3,12], index: 9, kind: input, shape index: {}]
  %s10 = inlined_call_operand.vmem [shape: f32[1,12], index: 10, kind: input, shape index: {}]
  %s11 = inlined_call_operand.vmem [shape: bf16[12,64], index: 11, kind: input, shape index: {}]
  %s12 = inlined_call_operand.vmem [shape: f32[1,64], index: 12, kind: input, shape index: {}]
  %s13 = inlined_call_operand.vmem [shape: bf16[64,128], index: 13, kind: input, shape index: {}]
  %s14 = inlined_call_operand.vmem [shape: f32[1,128], index: 14, kind: input, shape index: {}]
  %s15 = inlined_call_operand.vmem [shape: bf16[128,784], index: 15, kind: input, shape index: {}]
  %s16 = inlined_call_operand.vmem [shape: f32[1,784], index: 16, kind: input, shape index: {}]
  %s17 = inlined_call_operand.vmem [shape: f32[64,3], index: 17, kind: output, shape index: {0}]
  %s18 = inlined_call_operand.hbm [shape: bf16[64,784], index: 18, kind: output, shape index: {1}]
  %19 = xla_tuple %s17, %s18
  %s20 = sld [smem:[#allocation0]]
  $region109: #{tpu_custom_call.1} parent=0
    _
  %s22 = ssub.s32 1, %s20
  %s23 = scalar_select 0, %s22, %s20
  $region1: #{tpu_custom_call.1} parent=0
    #allocation2 [shape = 'u8[114688]{0}', space=vmem, size = 0x1c000, scoped, tag = 'output window, operand 1']
    #allocation3 [shape = 's32[2]{0}', space=sflag, size = 0x8, scoped, tag = 'scoped memory for tpu_custom_call.1']
    %24 = vsyncpa [#allocation3], 0
    %s25 = scalar_lea.sflag [#allocation3], 1
    %26 = vsyncpa %s25, 0
    loop: start=0, step=1, limit=4
    $region2: #{tpu_custom_call.1} parent=1 // loop_pre_header
      _
    $region3: #{tpu_custom_call.1} parent=1 // loop_header
      %s28 = sphi 0, %s32
      %p29 = scmp.ge.s32.totalorder %s28, 4
      %s38 = sphi 0, %s40
      %s41 = sphi 0, %s38
      %s42 = sphi 0, %s41
      %s58 = sphi 0, %s42
      %s62 = sphi 0, %s62
      %s64 = sphi 0, %s62
      %s65 = sphi 0, %s64
      %s79 = sphi 0, %s65
      %s83 = sphi 0, %s83
      %s85 = sphi 0, %s83
      %s86 = sphi 0, %s85
      %s100 = sphi 0, %s86
      %s104 = sphi 0, %s104
      %s106 = sphi 0, %s104
      %s107 = sphi 0, %s106
      %s121 = sphi 0, %s107
      %s125 = sphi 0, %s125
      %s127 = sphi 0, %s125
      %s128 = sphi 0, %s127
      %s142 = sphi 0, %s128
      %s146 = sphi 0, %s146
      %s148 = sphi 0, %s146
      %s149 = sphi 0, %s148
      %s163 = sphi 0, %s149
      %s167 = sphi 0, %s167
      %s169 = sphi 0, %s167
      %s170 = sphi 0, %s169
      %s184 = sphi 0, %s170
      %s188 = sphi 0, %s188
      %s190 = sphi 0, %s188
      %s191 = sphi 0, %s190
      %s205 = sphi 0, %s191
      %s209 = sphi 0, %s209
      %s211 = sphi 0, %s209
      %s212 = sphi 0, %s211
      %s226 = sphi 0, %s212
      %s230 = sphi 0, %s230
      %s232 = sphi 0, %s230
      %s233 = sphi 0, %s232
      %s247 = sphi 0, %s233
      %s251 = sphi 0, %s251
      %s253 = sphi 0, %s251
      %s254 = sphi 0, %s253
      %s268 = sphi 0, %s254
      %s272 = sphi 0, %s272
      %s274 = sphi 0, %s272
      %s275 = sphi 0, %s274
      %s289 = sphi 0, %s275
      %s293 = sphi 0, %s293
      %s295 = sphi 0, %s293
      %s296 = sphi 0, %s295
      %s310 = sphi 0, %s296
      %s314 = sphi 0, %s314
      %s316 = sphi 0, %s314
      %s317 = sphi 0, %s316
      %s331 = sphi 0, %s317
      %s335 = sphi 0, %s335
      %s337 = sphi 0, %s335
      %s338 = sphi 0, %s337
      %s352 = sphi 0, %s338
      %s356 = sphi 0, %s356
      %s358 = sphi 0, %s356
      %s359 = sphi 0, %s358
      %s373 = sphi 0, %s359
      %s377 = sphi 0, %s377
      %s379 = sphi 0, %s377
      %s380 = sphi 0, %s379
      %s394 = sphi 0, %s380
      %s400 = sphi 0, %s402
      %s403 = sphi 0, %s400
      %s404 = sphi 0, %s403
      %s420 = sphi 0, %s404
      %s426 = sphi 0, %s428
      %s429 = sphi 0, %s426
      %s430 = sphi 0, %s429
      %s446 = sphi 0, %s430
    $region4: #{tpu_custom_call.1} parent=1 // loop_header_branch
      %31 = sbr.rel (%p29) target = $region8
    $region5: #{tpu_custom_call.1} parent=1 // loop_body
      %s33 = ssub.s32 %s28, 1
      %s34 = ssub.s32 %s28, 2
      %s35 = sadd.s32 %s28, 1
      %s36 = ssub.s32 %s28, %s35
      %p37 = scmp.eq.s32.totalorder %s36, 0
      %s39 = sadd.s32 %s38, 1
      %s40 = scalar_select %p37, %s38, %s39
      %p43 = pneg %p37
      %p44 = scmp.eq.s32.totalorder %s28, 1
      %p45 = por %p43, %p44
      %p46 = scmp.ne.s32.totalorder %s38, %s41
      %p47 = scmp.eq.s32.totalorder %s28, 0
      %p48 = por %p46, %p47
      %p49 = scmp.ne.s32.totalorder %s38, %s41
      %p50 = scmp.eq.s32.totalorder %s33, 1
      %p51 = por %p49, %p50
      %p52 = scmp.ne.s32.totalorder %s41, %s42
      %p53 = scmp.eq.s32.totalorder %s33, 0
      %p54 = por %p52, %p53
      %p55 = scmp.ne.s32.totalorder %s41, %s42
      %p56 = scmp.eq.s32.totalorder %s34, 1
      %p57 = por %p55, %p56
      %p59 = scmp.ne.s32.totalorder %s42, %s58
      %p60 = scmp.eq.s32.totalorder %s34, 0
      %p61 = por %p59, %p60
      %s63 = sadd.s32 %s62, 1
      %p66 = scmp.eq.s32.totalorder %s28, 1
      %p67 = scmp.ne.s32.totalorder %s62, %s64
      %p68 = scmp.eq.s32.totalorder %s28, 0
      %p69 = por %p67, %p68
      %p70 = scmp.ne.s32.totalorder %s62, %s64
      %p71 = scmp.eq.s32.totalorder %s33, 1
      %p72 = por %p70, %p71
      %p73 = scmp.ne.s32.totalorder %s64, %s65
      %p74 = scmp.eq.s32.totalorder %s33, 0
      %p75 = por %p73, %p74
      %p76 = scmp.ne.s32.totalorder %s64, %s65
      %p77 = scmp.eq.s32.totalorder %s34, 1
      %p78 = por %p76, %p77
      %p80 = scmp.ne.s32.totalorder %s65, %s79
      %p81 = scmp.eq.s32.totalorder %s34, 0
      %p82 = por %p80, %p81
      %s84 = sadd.s32 %s83, 1
      %p87 = scmp.eq.s32.totalorder %s28, 1
      %p88 = scmp.ne.s32.totalorder %s83, %s85
      %p89 = scmp.eq.s32.totalorder %s28, 0
      %p90 = por %p88, %p89
      %p91 = scmp.ne.s32.totalorder %s83, %s85
      %p92 = scmp.eq.s32.totalorder %s33, 1
      %p93 = por %p91, %p92
      %p94 = scmp.ne.s32.totalorder %s85, %s86
      %p95 = scmp.eq.s32.totalorder %s33, 0
      %p96 = por %p94, %p95
      %p97 = scmp.ne.s32.totalorder %s85, %s86
      %p98 = scmp.eq.s32.totalorder %s34, 1
      %p99 = por %p97, %p98
      %p101 = scmp.ne.s32.totalorder %s86, %s100
      %p102 = scmp.eq.s32.totalorder %s34, 0
      %p103 = por %p101, %p102
      %s105 = sadd.s32 %s104, 1
      %p108 = scmp.eq.s32.totalorder %s28, 1
      %p109 = scmp.ne.s32.totalorder %s104, %s106
      %p110 = scmp.eq.s32.totalorder %s28, 0
      %p111 = por %p109, %p110
      %p112 = scmp.ne.s32.totalorder %s104, %s106
      %p113 = scmp.eq.s32.totalorder %s33, 1
      %p114 = por %p112, %p113
      %p115 = scmp.ne.s32.totalorder %s106, %s107
      %p116 = scmp.eq.s32.totalorder %s33, 0
      %p117 = por %p115, %p116
      %p118 = scmp.ne.s32.totalorder %s106, %s107
      %p119 = scmp.eq.s32.totalorder %s34, 1
      %p120 = por %p118, %p119
      %p122 = scmp.ne.s32.totalorder %s107, %s121
      %p123 = scmp.eq.s32.totalorder %s34, 0
      %p124 = por %p122, %p123
      %s126 = sadd.s32 %s125, 1
      %p129 = scmp.eq.s32.totalorder %s28, 1
      %p130 = scmp.ne.s32.totalorder %s125, %s127
      %p131 = scmp.eq.s32.totalorder %s28, 0
      %p132 = por %p130, %p131
      %p133 = scmp.ne.s32.totalorder %s125, %s127
      %p134 = scmp.eq.s32.totalorder %s33, 1
      %p135 = por %p133, %p134
      %p136 = scmp.ne.s32.totalorder %s127, %s128
      %p137 = scmp.eq.s32.totalorder %s33, 0
      %p138 = por %p136, %p137
      %p139 = scmp.ne.s32.totalorder %s127, %s128
      %p140 = scmp.eq.s32.totalorder %s34, 1
      %p141 = por %p139, %p140
      %p143 = scmp.ne.s32.totalorder %s128, %s142
      %p144 = scmp.eq.s32.totalorder %s34, 0
      %p145 = por %p143, %p144
      %s147 = sadd.s32 %s146, 1
      %p150 = scmp.eq.s32.totalorder %s28, 1
      %p151 = scmp.ne.s32.totalorder %s146, %s148
      %p152 = scmp.eq.s32.totalorder %s28, 0
      %p153 = por %p151, %p152
      %p154 = scmp.ne.s32.totalorder %s146, %s148
      %p155 = scmp.eq.s32.totalorder %s33, 1
      %p156 = por %p154, %p155
      %p157 = scmp.ne.s32.totalorder %s148, %s149
      %p158 = scmp.eq.s32.totalorder %s33, 0
      %p159 = por %p157, %p158
      %p160 = scmp.ne.s32.totalorder %s148, %s149
      %p161 = scmp.eq.s32.totalorder %s34, 1
      %p162 = por %p160, %p161
      %p164 = scmp.ne.s32.totalorder %s149, %s163
      %p165 = scmp.eq.s32.totalorder %s34, 0
      %p166 = por %p164, %p165
      %s168 = sadd.s32 %s167, 1
      %p171 = scmp.eq.s32.totalorder %s28, 1
      %p172 = scmp.ne.s32.totalorder %s167, %s169
      %p173 = scmp.eq.s32.totalorder %s28, 0
      %p174 = por %p172, %p173
      %p175 = scmp.ne.s32.totalorder %s167, %s169
      %p176 = scmp.eq.s32.totalorder %s33, 1
      %p177 = por %p175, %p176
      %p178 = scmp.ne.s32.totalorder %s169, %s170
      %p179 = scmp.eq.s32.totalorder %s33, 0
      %p180 = por %p178, %p179
      %p181 = scmp.ne.s32.totalorder %s169, %s170
      %p182 = scmp.eq.s32.totalorder %s34, 1
      %p183 = por %p181, %p182
      %p185 = scmp.ne.s32.totalorder %s170, %s184
      %p186 = scmp.eq.s32.totalorder %s34, 0
      %p187 = por %p185, %p186
      %s189 = sadd.s32 %s188, 1
      %p192 = scmp.eq.s32.totalorder %s28, 1
      %p193 = scmp.ne.s32.totalorder %s188, %s190
      %p194 = scmp.eq.s32.totalorder %s28, 0
      %p195 = por %p193, %p194
      %p196 = scmp.ne.s32.totalorder %s188, %s190
      %p197 = scmp.eq.s32.totalorder %s33, 1
      %p198 = por %p196, %p197
      %p199 = scmp.ne.s32.totalorder %s190, %s191
      %p200 = scmp.eq.s32.totalorder %s33, 0
      %p201 = por %p199, %p200
      %p202 = scmp.ne.s32.totalorder %s190, %s191
      %p203 = scmp.eq.s32.totalorder %s34, 1
      %p204 = por %p202, %p203
      %p206 = scmp.ne.s32.totalorder %s191, %s205
      %p207 = scmp.eq.s32.totalorder %s34, 0
      %p208 = por %p206, %p207
      %s210 = sadd.s32 %s209, 1
      %p213 = scmp.eq.s32.totalorder %s28, 1
      %p214 = scmp.ne.s32.totalorder %s209, %s211
      %p215 = scmp.eq.s32.totalorder %s28, 0
      %p216 = por %p214, %p215
      %p217 = scmp.ne.s32.totalorder %s209, %s211
      %p218 = scmp.eq.s32.totalorder %s33, 1
      %p219 = por %p217, %p218
      %p220 = scmp.ne.s32.totalorder %s211, %s212
      %p221 = scmp.eq.s32.totalorder %s33, 0
      %p222 = por %p220, %p221
      %p223 = scmp.ne.s32.totalorder %s211, %s212
      %p224 = scmp.eq.s32.totalorder %s34, 1
      %p225 = por %p223, %p224
      %p227 = scmp.ne.s32.totalorder %s212, %s226
      %p228 = scmp.eq.s32.totalorder %s34, 0
      %p229 = por %p227, %p228
      %s231 = sadd.s32 %s230, 1
      %p234 = scmp.eq.s32.totalorder %s28, 1
      %p235 = scmp.ne.s32.totalorder %s230, %s232
      %p236 = scmp.eq.s32.totalorder %s28, 0
      %p237 = por %p235, %p236
      %p238 = scmp.ne.s32.totalorder %s230, %s232
      %p239 = scmp.eq.s32.totalorder %s33, 1
      %p240 = por %p238, %p239
      %p241 = scmp.ne.s32.totalorder %s232, %s233
      %p242 = scmp.eq.s32.totalorder %s33, 0
      %p243 = por %p241, %p242
      %p244 = scmp.ne.s32.totalorder %s232, %s233
      %p245 = scmp.eq.s32.totalorder %s34, 1
      %p246 = por %p244, %p245
      %p248 = scmp.ne.s32.totalorder %s233, %s247
      %p249 = scmp.eq.s32.totalorder %s34, 0
      %p250 = por %p248, %p249
      %s252 = sadd.s32 %s251, 1
      %p255 = scmp.eq.s32.totalorder %s28, 1
      %p256 = scmp.ne.s32.totalorder %s251, %s253
      %p257 = scmp.eq.s32.totalorder %s28, 0
      %p258 = por %p256, %p257
      %p259 = scmp.ne.s32.totalorder %s251, %s253
      %p260 = scmp.eq.s32.totalorder %s33, 1
      %p261 = por %p259, %p260
      %p262 = scmp.ne.s32.totalorder %s253, %s254
      %p263 = scmp.eq.s32.totalorder %s33, 0
      %p264 = por %p262, %p263
      %p265 = scmp.ne.s32.totalorder %s253, %s254
      %p266 = scmp.eq.s32.totalorder %s34, 1
      %p267 = por %p265, %p266
      %p269 = scmp.ne.s32.totalorder %s254, %s268
      %p270 = scmp.eq.s32.totalorder %s34, 0
      %p271 = por %p269, %p270
      %s273 = sadd.s32 %s272, 1
      %p276 = scmp.eq.s32.totalorder %s28, 1
      %p277 = scmp.ne.s32.totalorder %s272, %s274
      %p278 = scmp.eq.s32.totalorder %s28, 0
      %p279 = por %p277, %p278
      %p280 = scmp.ne.s32.totalorder %s272, %s274
      %p281 = scmp.eq.s32.totalorder %s33, 1
      %p282 = por %p280, %p281
      %p283 = scmp.ne.s32.totalorder %s274, %s275
      %p284 = scmp.eq.s32.totalorder %s33, 0
      %p285 = por %p283, %p284
      %p286 = scmp.ne.s32.totalorder %s274, %s275
      %p287 = scmp.eq.s32.totalorder %s34, 1
      %p288 = por %p286, %p287
      %p290 = scmp.ne.s32.totalorder %s275, %s289
      %p291 = scmp.eq.s32.totalorder %s34, 0
      %p292 = por %p290, %p291
      %s294 = sadd.s32 %s293, 1
      %p297 = scmp.eq.s32.totalorder %s28, 1
      %p298 = scmp.ne.s32.totalorder %s293, %s295
      %p299 = scmp.eq.s32.totalorder %s28, 0
      %p300 = por %p298, %p299
      %p301 = scmp.ne.s32.totalorder %s293, %s295
      %p302 = scmp.eq.s32.totalorder %s33, 1
      %p303 = por %p301, %p302
      %p304 = scmp.ne.s32.totalorder %s295, %s296
      %p305 = scmp.eq.s32.totalorder %s33, 0
      %p306 = por %p304, %p305
      %p307 = scmp.ne.s32.totalorder %s295, %s296
      %p308 = scmp.eq.s32.totalorder %s34, 1
      %p309 = por %p307, %p308
      %p311 = scmp.ne.s32.totalorder %s296, %s310
      %p312 = scmp.eq.s32.totalorder %s34, 0
      %p313 = por %p311, %p312
      %s315 = sadd.s32 %s314, 1
      %p318 = scmp.eq.s32.totalorder %s28, 1
      %p319 = scmp.ne.s32.totalorder %s314, %s316
      %p320 = scmp.eq.s32.totalorder %s28, 0
      %p321 = por %p319, %p320
      %p322 = scmp.ne.s32.totalorder %s314, %s316
      %p323 = scmp.eq.s32.totalorder %s33, 1
      %p324 = por %p322, %p323
      %p325 = scmp.ne.s32.totalorder %s316, %s317
      %p326 = scmp.eq.s32.totalorder %s33, 0
      %p327 = por %p325, %p326
      %p328 = scmp.ne.s32.totalorder %s316, %s317
      %p329 = scmp.eq.s32.totalorder %s34, 1
      %p330 = por %p328, %p329
      %p332 = scmp.ne.s32.totalorder %s317, %s331
      %p333 = scmp.eq.s32.totalorder %s34, 0
      %p334 = por %p332, %p333
      %s336 = sadd.s32 %s335, 1
      %p339 = scmp.eq.s32.totalorder %s28, 1
      %p340 = scmp.ne.s32.totalorder %s335, %s337
      %p341 = scmp.eq.s32.totalorder %s28, 0
      %p342 = por %p340, %p341
      %p343 = scmp.ne.s32.totalorder %s335, %s337
      %p344 = scmp.eq.s32.totalorder %s33, 1
      %p345 = por %p343, %p344
      %p346 = scmp.ne.s32.totalorder %s337, %s338
      %p347 = scmp.eq.s32.totalorder %s33, 0
      %p348 = por %p346, %p347
      %p349 = scmp.ne.s32.totalorder %s337, %s338
      %p350 = scmp.eq.s32.totalorder %s34, 1
      %p351 = por %p349, %p350
      %p353 = scmp.ne.s32.totalorder %s338, %s352
      %p354 = scmp.eq.s32.totalorder %s34, 0
      %p355 = por %p353, %p354
      %s357 = sadd.s32 %s356, 1
      %p360 = scmp.eq.s32.totalorder %s28, 1
      %p361 = scmp.ne.s32.totalorder %s356, %s358
      %p362 = scmp.eq.s32.totalorder %s28, 0
      %p363 = por %p361, %p362
      %p364 = scmp.ne.s32.totalorder %s356, %s358
      %p365 = scmp.eq.s32.totalorder %s33, 1
      %p366 = por %p364, %p365
      %p367 = scmp.ne.s32.totalorder %s358, %s359
      %p368 = scmp.eq.s32.totalorder %s33, 0
      %p369 = por %p367, %p368
      %p370 = scmp.ne.s32.totalorder %s358, %s359
      %p371 = scmp.eq.s32.totalorder %s34, 1
      %p372 = por %p370, %p371
      %p374 = scmp.ne.s32.totalorder %s359, %s373
      %p375 = scmp.eq.s32.totalorder %s34, 0
      %p376 = por %p374, %p375
      %s378 = sadd.s32 %s377, 1
      %p381 = scmp.eq.s32.totalorder %s28, 1
      %p382 = scmp.ne.s32.totalorder %s377, %s379
      %p383 = scmp.eq.s32.totalorder %s28, 0
      %p384 = por %p382, %p383
      %p385 = scmp.ne.s32.totalorder %s377, %s379
      %p386 = scmp.eq.s32.totalorder %s33, 1
      %p387 = por %p385, %p386
      %p388 = scmp.ne.s32.totalorder %s379, %s380
      %p389 = scmp.eq.s32.totalorder %s33, 0
      %p390 = por %p388, %p389
      %p391 = scmp.ne.s32.totalorder %s379, %s380
      %p392 = scmp.eq.s32.totalorder %s34, 1
      %p393 = por %p391, %p392
      %p395 = scmp.ne.s32.totalorder %s380, %s394
      %p396 = scmp.eq.s32.totalorder %s34, 0
      %p397 = por %p395, %p396
      %s398 = ssub.s32 %s28, %s35
      %p399 = scmp.eq.s32.totalorder %s398, 0
      %s401 = sadd.s32 %s400, 1
      %s402 = scalar_select %p399, %s400, %s401
      %p405 = pneg %p399
      %p406 = scmp.eq.s32.totalorder %s28, 1
      %p407 = por %p405, %p406
      %p408 = scmp.ne.s32.totalorder %s400, %s403
      %p409 = scmp.eq.s32.totalorder %s28, 0
      %p410 = por %p408, %p409
      %p411 = scmp.ne.s32.totalorder %s400, %s403
      %p412 = scmp.eq.s32.totalorder %s33, 1
      %p413 = por %p411, %p412
      %p414 = scmp.ne.s32.totalorder %s403, %s404
      %p415 = scmp.eq.s32.totalorder %s33, 0
      %p416 = por %p414, %p415
      %p417 = scmp.ne.s32.totalorder %s403, %s404
      %p418 = scmp.eq.s32.totalorder %s34, 1
      %p419 = por %p417, %p418
      %p421 = scmp.ne.s32.totalorder %s404, %s420
      %p422 = scmp.eq.s32.totalorder %s34, 0
      %p423 = por %p421, %p422
      %s424 = ssub.s32 %s28, %s35
      %p425 = scmp.eq.s32.totalorder %s424, 0
      %s427 = sadd.s32 %s426, 1
      %s428 = scalar_select %p425, %s426, %s427
      %p431 = pneg %p425
      %p432 = scmp.eq.s32.totalorder %s28, 1
      %p433 = por %p431, %p432
      %p434 = scmp.ne.s32.totalorder %s426, %s429
      %p435 = scmp.eq.s32.totalorder %s28, 0
      %p436 = por %p434, %p435
      %p437 = scmp.ne.s32.totalorder %s426, %s429
      %p438 = scmp.eq.s32.totalorder %s33, 1
      %p439 = por %p437, %p438
      %p440 = scmp.ne.s32.totalorder %s429, %s430
      %p441 = scmp.eq.s32.totalorder %s33, 0
      %p442 = por %p440, %p441
      %p443 = scmp.ne.s32.totalorder %s429, %s430
      %p444 = scmp.eq.s32.totalorder %s34, 1
      %p445 = por %p443, %p444
      %p447 = scmp.ne.s32.totalorder %s430, %s446
      %p448 = scmp.eq.s32.totalorder %s34, 0
      %p449 = por %p447, %p448
      %p450 = scmp.le.s32.totalorder 1, %s28
      %p451 = scmp.lt.s32.totalorder %s28, 3
      %p452 = pnand %p450, %p451
      %p453 = pneg %p452
      // Predicated region
      $region9: #{tpu_custom_call.1} parent=5 // pred_check
        _
      $region10: #{tpu_custom_call.1} parent=5 // pred_check_branch
        %455 = sbr.rel (%p452) target = $region12
      $region11: #{tpu_custom_call.1} parent=5 // pred_region
        %s456 = ssub.s32 %s28, 1
        // Predicated region
        $region13: #{tpu_custom_call.1} parent=11 // pred_check
          %p457 = pneg %p75
        $region14: #{tpu_custom_call.1} parent=11 // pred_check_branch
          %459 = sbr.rel (%p457) target = $region16
        $region15: #{tpu_custom_call.1} parent=11 // pred_region
          _
        $region16: #{tpu_custom_call.1} parent=11 // pred_fallthru
          _
        // Predicated region
        $region17: #{tpu_custom_call.1} parent=11 // pred_check
          %p460 = pneg %p96
        $region18: #{tpu_custom_call.1} parent=11 // pred_check_branch
          %462 = sbr.rel (%p460) target = $region20
        $region19: #{tpu_custom_call.1} parent=11 // pred_region
          _
        $region20: #{tpu_custom_call.1} parent=11 // pred_fallthru
          _
        // Predicated region
        $region21: #{tpu_custom_call.1} parent=11 // pred_check
          %p463 = pneg %p117
        $region22: #{tpu_custom_call.1} parent=11 // pred_check_branch
          %465 = sbr.rel (%p463) target = $region24
        $region23: #{tpu_custom_call.1} parent=11 // pred_region
          _
        $region24: #{tpu_custom_call.1} parent=11 // pred_fallthru
          _
        // Predicated region
        $region25: #{tpu_custom_call.1} parent=11 // pred_check
          %p466 = pneg %p138
        $region26: #{tpu_custom_call.1} parent=11 // pred_check_branch
          %468 = sbr.rel (%p466) target = $region28
        $region27: #{tpu_custom_call.1} parent=11 // pred_region
          _
        $region28: #{tpu_custom_call.1} parent=11 // pred_fallthru
          _
        // Predicated region
        $region29: #{tpu_custom_call.1} parent=11 // pred_check
          %p469 = pneg %p159
        $region30: #{tpu_custom_call.1} parent=11 // pred_check_branch
          %471 = sbr.rel (%p469) target = $region32
        $region31: #{tpu_custom_call.1} parent=11 // pred_region
          _
        $region32: #{tpu_custom_call.1} parent=11 // pred_fallthru
          _
        // Predicated region
        $region33: #{tpu_custom_call.1} parent=11 // pred_check
          %p472 = pneg %p180
        $region34: #{tpu_custom_call.1} parent=11 // pred_check_branch
          %474 = sbr.rel (%p472) target = $region36
        $region35: #{tpu_custom_call.1} parent=11 // pred_region
          _
        $region36: #{tpu_custom_call.1} parent=11 // pred_fallthru
          _
        // Predicated region
        $region37: #{tpu_custom_call.1} parent=11 // pred_check
          %p475 = pneg %p201
        $region38: #{tpu_custom_call.1} parent=11 // pred_check_branch
          %477 = sbr.rel (%p475) target = $region40
        $region39: #{tpu_custom_call.1} parent=11 // pred_region
          _
        $region40: #{tpu_custom_call.1} parent=11 // pred_fallthru
          _
        // Predicated region
        $region41: #{tpu_custom_call.1} parent=11 // pred_check
          %p478 = pneg %p222
        $region42: #{tpu_custom_call.1} parent=11 // pred_check_branch
          %480 = sbr.rel (%p478) target = $region44
        $region43: #{tpu_custom_call.1} parent=11 // pred_region
          _
        $region44: #{tpu_custom_call.1} parent=11 // pred_fallthru
          _
        // Predicated region
        $region45: #{tpu_custom_call.1} parent=11 // pred_check
          %p481 = pneg %p243
        $region46: #{tpu_custom_call.1} parent=11 // pred_check_branch
          %483 = sbr.rel (%p481) target = $region48
        $region47: #{tpu_custom_call.1} parent=11 // pred_region
          _
        $region48: #{tpu_custom_call.1} parent=11 // pred_fallthru
          _
        // Predicated region
        $region49: #{tpu_custom_call.1} parent=11 // pred_check
          %p484 = pneg %p264
        $region50: #{tpu_custom_call.1} parent=11 // pred_check_branch
          %486 = sbr.rel (%p484) target = $region52
        $region51: #{tpu_custom_call.1} parent=11 // pred_region
          _
        $region52: #{tpu_custom_call.1} parent=11 // pred_fallthru
          _
        // Predicated region
        $region53: #{tpu_custom_call.1} parent=11 // pred_check
          %p487 = pneg %p285
        $region54: #{tpu_custom_call.1} parent=11 // pred_check_branch
          %489 = sbr.rel (%p487) target = $region56
        $region55: #{tpu_custom_call.1} parent=11 // pred_region
          _
        $region56: #{tpu_custom_call.1} parent=11 // pred_fallthru
          _
        // Predicated region
        $region57: #{tpu_custom_call.1} parent=11 // pred_check
          %p490 = pneg %p306
        $region58: #{tpu_custom_call.1} parent=11 // pred_check_branch
          %492 = sbr.rel (%p490) target = $region60
        $region59: #{tpu_custom_call.1} parent=11 // pred_region
          _
        $region60: #{tpu_custom_call.1} parent=11 // pred_fallthru
          _
        // Predicated region
        $region61: #{tpu_custom_call.1} parent=11 // pred_check
          %p493 = pneg %p327
        $region62: #{tpu_custom_call.1} parent=11 // pred_check_branch
          %495 = sbr.rel (%p493) target = $region64
        $region63: #{tpu_custom_call.1} parent=11 // pred_region
          _
        $region64: #{tpu_custom_call.1} parent=11 // pred_fallthru
          _
        // Predicated region
        $region65: #{tpu_custom_call.1} parent=11 // pred_check
          %p496 = pneg %p348
        $region66: #{tpu_custom_call.1} parent=11 // pred_check_branch
          %498 = sbr.rel (%p496) target = $region68
        $region67: #{tpu_custom_call.1} parent=11 // pred_region
          _
        $region68: #{tpu_custom_call.1} parent=11 // pred_fallthru
          _
        // Predicated region
        $region69: #{tpu_custom_call.1} parent=11 // pred_check
          %p499 = pneg %p369
        $region70: #{tpu_custom_call.1} parent=11 // pred_check_branch
          %501 = sbr.rel (%p499) target = $region72
        $region71: #{tpu_custom_call.1} parent=11 // pred_region
          _
        $region72: #{tpu_custom_call.1} parent=11 // pred_fallthru
          _
        // Predicated region
        $region73: #{tpu_custom_call.1} parent=11 // pred_check
          %p502 = pneg %p390
        $region74: #{tpu_custom_call.1} parent=11 // pred_check_branch
          %504 = sbr.rel (%p502) target = $region76
        $region75: #{tpu_custom_call.1} parent=11 // pred_region
          _
        $region76: #{tpu_custom_call.1} parent=11 // pred_fallthru
          _
      $region12: #{tpu_custom_call.1} parent=5 // pred_fallthru
        _
      %p505 = scmp.lt.s32.totalorder %s28, 2
      // Predicated region
      $region77: #{tpu_custom_call.1} parent=5 // pred_check
        %p506 = pneg %p505
      $region78: #{tpu_custom_call.1} parent=5 // pred_check_branch
        %508 = sbr.rel (%p506) target = $region80
      $region79: #{tpu_custom_call.1} parent=5 // pred_region
        // Predicated region
        $region81: #{tpu_custom_call.1} parent=79 // pred_check
          %p509 = pneg %p48
        $region82: #{tpu_custom_call.1} parent=79 // pred_check_branch
          %511 = sbr.rel (%p509) target = $region84
        $region83: #{tpu_custom_call.1} parent=79 // pred_region
          %s512 = smul.u32 4, %s28
          %p513 = scmp.lt.s32.totalorder %s512, 7
          %s514 = scalar_select %p513, %s512, 7
          %s515 = smul.addr %s514, 7
          %s516 = smul.addr %s515, 8
          %s517 = scalar_lea.vmem %s0, %s516
          %s518 = smul.u32 4, %s28
        $region84: #{tpu_custom_call.1} parent=79 // pred_fallthru
          _
      $region80: #{tpu_custom_call.1} parent=5 // pred_fallthru
        _
      %p519 = scmp.le.s32.totalorder 1, %s28
      %p520 = scmp.lt.s32.totalorder %s28, 3
      %p521 = pnand %p519, %p520
      %p522 = pneg %p521
      // Predicated region
      $region85: #{tpu_custom_call.1} parent=5 // pred_check
        _
      $region86: #{tpu_custom_call.1} parent=5 // pred_check_branch
        %524 = sbr.rel (%p521) target = $region88
      $region87: #{tpu_custom_call.1} parent=5 // pred_region
        %s525 = ssub.s32 %s28, 1
        %s526 = smul.u32 4, %s33
        %p527 = scmp.lt.s32.totalorder %s526, 7
        %s528 = scalar_select %p527, %s526, 7
        %s529 = smul.addr %s528, 7
        %s530 = smul.addr %s529, 8
        %s531 = scalar_lea.vmem %s0, %s530
        %p532 = pneg %p54
        %p533 = pneg %p51
        %p534 = pneg %p75
        %p535 = pneg %p72
        %p536 = pneg %p96
        %p537 = pneg %p93
        %p538 = pneg %p117
        %p539 = pneg %p114
        %p540 = pneg %p138
        %p541 = pneg %p135
        %p542 = pneg %p159
        %p543 = pneg %p156
        %p544 = pneg %p180
        %p545 = pneg %p177
        %p546 = pneg %p201
        %p547 = pneg %p198
        %p548 = pneg %p222
        %p549 = pneg %p219
        %p550 = pneg %p243
        %p551 = pneg %p240
        %p552 = pneg %p264
        %p553 = pneg %p261
        %p554 = pneg %p285
        %p555 = pneg %p282
        %p556 = pneg %p306
        %p557 = pneg %p303
        %p558 = pneg %p327
        %p559 = pneg %p324
        %p560 = pneg %p348
        %p561 = pneg %p345
        %p562 = pneg %p369
        %p563 = pneg %p366
        %p564 = pneg %p390
        %p565 = pneg %p387
        %p566 = pneg %p416
        %p567 = pneg %p413
        %s568 = smul.u32 4, %s33
        %p569 = scmp.lt.s32.totalorder %s568, 7
        %s570 = scalar_select %p569, %s568, 7
        %s571 = smul.addr %s570, 8
        %s572 = scalar_lea.vmem %s17, %s571
        %p573 = pneg %p442
        %p574 = pneg %p439
        %s575 = sand.u32 %s429, 1
        %s576 = scalar_lea.sflag [#allocation3], %s575
        %s577 = sand.u32 %s429, 1
        %s578 = smul.addr %s577, 112
        %s579 = scalar_lea.vmem [#allocation2], %s578
        %s580 = smul.u32 4, %s33
        %p581 = scmp.lt.s32.totalorder %s580, 7
        %s582 = scalar_select %p581, %s580, 7
        %s583 = smul.addr %s582, 7
        %s584 = smul.addr %s583, 8
        %s585 = scalar_lea.vmem %s0, %s584
        %s586 = smul.u32 4, %s33
        %s587 = smul.u32 4, %s33
        %p588 = scmp.lt.s32.totalorder %s587, 7
        %s589 = scalar_select %p588, %s587, 7
        %s590 = smul.addr %s589, 8
        %s591 = scalar_lea.vmem %s17, %s590
        %s592 = smul.u32 4, %s33
        %s593 = smul.u32 4, %s33
        %v597 = vld [vmem:[%s585] sm:$0xff]
        %v598 = vld [vmem:[%s585 + $0x8] sm:$0xff]
        %v599 = vld [vmem:[%s585 + $0x10] sm:$0xff]
        %v600 = vld [vmem:[%s585 + $0x18] sm:$0xff]
        %v601 = vld [vmem:[%s585 + $0x20] sm:$0xff]
        %v602 = vld [vmem:[%s585 + $0x28] sm:$0xff]
        %v603 = vld [vmem:[%s585 + $0x30] sm:$0xff]
        %v604 = vld [vmem:[%s585 + $0x38] sm:$0xff]
        %v605 = vld [vmem:[%s585 + $0x40] sm:$0xff]
        %v606 = vld [vmem:[%s585 + $0x48] sm:$0xff]
        %v607 = vld [vmem:[%s585 + $0x50] sm:$0xff]
        %v608 = vld [vmem:[%s585 + $0x58] sm:$0xff]
        %v609 = vld [vmem:[%s585 + $0x60] sm:$0xff]
        %v610 = vld [vmem:[%s585 + $0x68] sm:$0xff]
        %v611 = vld [vmem:[%s585 + $0x70] sm:$0xff]
        %v612 = vld [vmem:[%s585 + $0x78] sm:$0xff]
        %v613 = vld [vmem:[%s585 + $0x80] sm:$0xff]
        %v614 = vld [vmem:[%s585 + $0x88] sm:$0xff]
        %v615 = vld [vmem:[%s585 + $0x90] sm:$0xff]
        %v616 = vld [vmem:[%s585 + $0x98] sm:$0xff]
        %v617 = vld [vmem:[%s585 + $0xa0] sm:$0xff]
        %v618 = vld [vmem:[%s585 + $0xa8] sm:$0xff]
        %v619 = vld [vmem:[%s585 + $0xb0] sm:$0xff]
        %v620 = vld [vmem:[%s585 + $0xb8] sm:$0xff]
        %v621 = vld [vmem:[%s585 + $0xc0] sm:$0xff]
        %v622 = vld [vmem:[%s585 + $0xc8] sm:$0xff]
        %v623 = vld [vmem:[%s585 + $0xd0] sm:$0xff]
        %v624 = vld [vmem:[%s585 + $0xd8] sm:$0xff]
        %v625 = vpack.c.bf16 %v604, %v597
        %v626 = vpack.c.bf16 %v605, %v598
        %v627 = vpack.c.bf16 %v606, %v599
        %v628 = vpack.c.bf16 %v607, %v600
        %v629 = vpack.c.bf16 %v608, %v601
        %v630 = vpack.c.bf16 %v609, %v602
        %v631 = vpack.c.bf16 %v610, %v603
        %v632 = vpack.c.bf16 %v618, %v611
        %v633 = vpack.c.bf16 %v619, %v612
        %v634 = vpack.c.bf16 %v620, %v613
        %v635 = vpack.c.bf16 %v621, %v614
        %v636 = vpack.c.bf16 %v622, %v615
        %v637 = vpack.c.bf16 %v623, %v616
        %v638 = vpack.c.bf16 %v624, %v617
        %v639 = vld [vmem:[%s1] sm:$0xf]
        %v640 = vld [vmem:[%s1 + $0x4] sm:$0xf]
        %v641 = vld [vmem:[%s1 + $0x8] sm:$0xf]
        %v642 = vld [vmem:[%s1 + $0xc] sm:$0xf]
        %v643 = vld [vmem:[%s1 + $0x10] sm:$0xf]
        %v644 = vld [vmem:[%s1 + $0x14] sm:$0xf]
        %v645 = vld [vmem:[%s1 + $0x18] sm:$0xf]
        %v646 = vld [vmem:[%s1 + $0x1c] sm:$0xf]
        %v647 = vld [vmem:[%s1 + $0x20] sm:$0xf]
        %v648 = vld [vmem:[%s1 + $0x24] sm:$0xf]
        %v649 = vld [vmem:[%s1 + $0x28] sm:$0xf]
        %v650 = vld [vmem:[%s1 + $0x2c] sm:$0xf]
        %v651 = vld [vmem:[%s1 + $0x30] sm:$0xf]
        %v652 = vld [vmem:[%s1 + $0x34] sm:$0xf]
        %v653 = vld [vmem:[%s1 + $0x38] sm:$0xf]
        %v654 = vld [vmem:[%s1 + $0x3c] sm:$0xf]
        %v655 = vld [vmem:[%s1 + $0x40] sm:$0xf]
        %v656 = vld [vmem:[%s1 + $0x44] sm:$0xf]
        %v657 = vld [vmem:[%s1 + $0x48] sm:$0xf]
        %v658 = vld [vmem:[%s1 + $0x4c] sm:$0xf]
        %v659 = vld [vmem:[%s1 + $0x50] sm:$0xf]
        %v660 = vld [vmem:[%s1 + $0x54] sm:$0xf]
        %v661 = vld [vmem:[%s1 + $0x58] sm:$0xf]
        %v662 = vld [vmem:[%s1 + $0x5c] sm:$0xf]
        %v663 = vld [vmem:[%s1 + $0x60] sm:$0xf]
        %v664 = vld [vmem:[%s1 + $0x64] sm:$0xf]
        %v665 = vld [vmem:[%s1 + $0x68] sm:$0xf]
        %v666 = vld [vmem:[%s1 + $0x6c] sm:$0xf]
        %v667 = vld [vmem:[%s1 + $0x70] sm:$0xf]
        %v668 = vld [vmem:[%s1 + $0x74] sm:$0xf]
        %v669 = vld [vmem:[%s1 + $0x78] sm:$0xf]
        %v670 = vld [vmem:[%s1 + $0x7c] sm:$0xf]
        %v671 = vld [vmem:[%s1 + $0x80] sm:$0xf]
        %v672 = vld [vmem:[%s1 + $0x84] sm:$0xf]
        %v673 = vld [vmem:[%s1 + $0x88] sm:$0xf]
        %v674 = vld [vmem:[%s1 + $0x8c] sm:$0xf]
        %v675 = vld [vmem:[%s1 + $0x90] sm:$0xf]
        %v676 = vld [vmem:[%s1 + $0x94] sm:$0xf]
        %v677 = vld [vmem:[%s1 + $0x98] sm:$0xf]
        %v678 = vld [vmem:[%s1 + $0x9c] sm:$0xf]
        %v679 = vld [vmem:[%s1 + $0xa0] sm:$0xf]
        %v680 = vld [vmem:[%s1 + $0xa4] sm:$0xf]
        %v681 = vld [vmem:[%s1 + $0xa8] sm:$0xf]
        %v682 = vld [vmem:[%s1 + $0xac] sm:$0xf]
        %v683 = vld [vmem:[%s1 + $0xb0] sm:$0xf]
        %v684 = vld [vmem:[%s1 + $0xb4] sm:$0xf]
        %v685 = vld [vmem:[%s1 + $0xb8] sm:$0xf]
        %v686 = vld [vmem:[%s1 + $0xbc] sm:$0xf]
        %v687 = vld [vmem:[%s1 + $0xc0] sm:$0xf]
        %v688 = vld [vmem:[%s1 + $0xc4] sm:$0xf]
        %v689 = vld [vmem:[%s1 + $0xc8] sm:$0xf]
        %v690 = vld [vmem:[%s1 + $0xcc] sm:$0xf]
        %v691 = vld [vmem:[%s1 + $0xd0] sm:$0xf]
        %v692 = vld [vmem:[%s1 + $0xd4] sm:$0xf]
        %v693 = vld [vmem:[%s1 + $0xd8] sm:$0xf]
        %v694 = vld [vmem:[%s1 + $0xdc] sm:$0xf]
        %v695 = vld [vmem:[%s1 + $0xe0] sm:$0xf]
        %v696 = vld [vmem:[%s1 + $0xe4] sm:$0xf]
        %v697 = vld [vmem:[%s1 + $0xe8] sm:$0xf]
        %v698 = vld [vmem:[%s1 + $0xec] sm:$0xf]
        %v699 = vld [vmem:[%s1 + $0xf0] sm:$0xf]
        %v700 = vld [vmem:[%s1 + $0xf4] sm:$0xf]
        %v701 = vld [vmem:[%s1 + $0xf8] sm:$0xf]
        %v702 = vld [vmem:[%s1 + $0xfc] sm:$0xf]
        %v703 = vld [vmem:[%s1 + $0x100] sm:$0xf]
        %v704 = vld [vmem:[%s1 + $0x104] sm:$0xf]
        %v705 = vld [vmem:[%s1 + $0x108] sm:$0xf]
        %v706 = vld [vmem:[%s1 + $0x10c] sm:$0xf]
        %v707 = vld [vmem:[%s1 + $0x110] sm:$0xf]
        %v708 = vld [vmem:[%s1 + $0x114] sm:$0xf]
        %v709 = vld [vmem:[%s1 + $0x118] sm:$0xf]
        %v710 = vld [vmem:[%s1 + $0x11c] sm:$0xf]
        %v711 = vld [vmem:[%s1 + $0x120] sm:$0xf]
        %v712 = vld [vmem:[%s1 + $0x124] sm:$0xf]
        %v713 = vld [vmem:[%s1 + $0x128] sm:$0xf]
        %v714 = vld [vmem:[%s1 + $0x12c] sm:$0xf]
        %v715 = vld [vmem:[%s1 + $0x130] sm:$0xf]
        %v716 = vld [vmem:[%s1 + $0x134] sm:$0xf]
        %v717 = vld [vmem:[%s1 + $0x138] sm:$0xf]
        %v718 = vld [vmem:[%s1 + $0x13c] sm:$0xf]
        %v719 = vld [vmem:[%s1 + $0x140] sm:$0xf]
        %v720 = vld [vmem:[%s1 + $0x144] sm:$0xf]
        %v721 = vld [vmem:[%s1 + $0x148] sm:$0xf]
        %v722 = vld [vmem:[%s1 + $0x14c] sm:$0xf]
        %v723 = vld [vmem:[%s1 + $0x150] sm:$0xf]
        %v724 = vld [vmem:[%s1 + $0x154] sm:$0xf]
        %v725 = vld [vmem:[%s1 + $0x158] sm:$0xf]
        %v726 = vld [vmem:[%s1 + $0x15c] sm:$0xf]
        %v727 = vld [vmem:[%s1 + $0x160] sm:$0xf]
        %v728 = vld [vmem:[%s1 + $0x164] sm:$0xf]
        %v729 = vld [vmem:[%s1 + $0x168] sm:$0xf]
        %v730 = vld [vmem:[%s1 + $0x16c] sm:$0xf]
        %v731 = vld [vmem:[%s1 + $0x170] sm:$0xf]
        %v732 = vld [vmem:[%s1 + $0x174] sm:$0xf]
        %v733 = vld [vmem:[%s1 + $0x178] sm:$0xf]
        %v734 = vld [vmem:[%s1 + $0x17c] sm:$0xf]
        %v735 = vld [vmem:[%s1 + $0x180] sm:$0xf]
        %v736 = vld [vmem:[%s1 + $0x184] sm:$0xf]
        %v737 = vld [vmem:[%s2] sm:$0x1]
        %v739 = vlaneseq
        %v740 = vshrl.u32 %v739, 7
        %v741 = vsub.s32 0, %v740
        %v742 = vrot.slane %v737, %v741
        %v842 = vunpack.c.l.b16 %v639
        %v843 = vunpack.c.l.b16 %v640
        %v844 = vunpack.c.l.b16 %v641
        %v845 = vunpack.c.l.b16 %v642
        %v846 = vunpack.c.l.b16 %v643
        %v847 = vunpack.c.l.b16 %v644
        %v848 = vunpack.c.l.b16 %v645
        %v849 = vunpack.c.l.b16 %v646
        %v850 = vunpack.c.l.b16 %v647
        %v851 = vunpack.c.l.b16 %v648
        %v852 = vunpack.c.l.b16 %v649
        %v853 = vunpack.c.l.b16 %v650
        %v854 = vunpack.c.l.b16 %v651
        %v855 = vunpack.c.l.b16 %v652
        %v856 = vunpack.c.l.b16 %v653
        %v857 = vunpack.c.l.b16 %v654
        %v858 = vunpack.c.l.b16 %v655
        %v859 = vunpack.c.l.b16 %v656
        %v860 = vunpack.c.l.b16 %v657
        %v861 = vunpack.c.l.b16 %v658
        %v862 = vunpack.c.l.b16 %v659
        %v863 = vunpack.c.l.b16 %v660
        %v864 = vunpack.c.l.b16 %v661
        %v865 = vunpack.c.l.b16 %v662
        %v866 = vunpack.c.l.b16 %v663
        %v867 = vunpack.c.l.b16 %v664
        %v868 = vunpack.c.l.b16 %v665
        %v869 = vunpack.c.l.b16 %v666
        %v870 = vunpack.c.l.b16 %v667
        %v871 = vunpack.c.l.b16 %v668
        %v872 = vunpack.c.l.b16 %v669
        %v873 = vunpack.c.l.b16 %v670
        %v874 = vunpack.c.l.b16 %v671
        %v875 = vunpack.c.l.b16 %v672
        %v876 = vunpack.c.l.b16 %v673
        %v877 = vunpack.c.l.b16 %v674
        %v878 = vunpack.c.l.b16 %v675
        %v879 = vunpack.c.l.b16 %v676
        %v880 = vunpack.c.l.b16 %v677
        %v881 = vunpack.c.l.b16 %v678
        %v882 = vunpack.c.l.b16 %v679
        %v883 = vunpack.c.l.b16 %v680
        %v884 = vunpack.c.l.b16 %v681
        %v885 = vunpack.c.l.b16 %v682
        %v886 = vunpack.c.l.b16 %v683
        %v887 = vunpack.c.l.b16 %v684
        %v888 = vunpack.c.l.b16 %v685
        %v889 = vunpack.c.l.b16 %v686
        %v890 = vunpack.c.l.b16 %v687
        %v891 = vunpack.c.l.b16 %v688
        %v892 = vunpack.c.l.b16 %v689
        %v893 = vunpack.c.l.b16 %v690
        %v894 = vunpack.c.l.b16 %v691
        %v895 = vunpack.c.l.b16 %v692
        %v896 = vunpack.c.l.b16 %v693
        %v897 = vunpack.c.l.b16 %v694
        %v898 = vunpack.c.l.b16 %v695
        %v899 = vunpack.c.l.b16 %v696
        %v900 = vunpack.c.l.b16 %v697
        %v901 = vunpack.c.l.b16 %v698
        %v902 = vunpack.c.l.b16 %v699
        %v903 = vunpack.c.l.b16 %v700
        %v904 = vunpack.c.l.b16 %v701
        %v905 = vunpack.c.l.b16 %v702
        %v906 = vunpack.c.l.b16 %v703
        %v907 = vunpack.c.l.b16 %v704
        %v908 = vunpack.c.l.b16 %v705
        %v909 = vunpack.c.l.b16 %v706
        %v910 = vunpack.c.l.b16 %v707
        %v911 = vunpack.c.l.b16 %v708
        %v912 = vunpack.c.l.b16 %v709
        %v913 = vunpack.c.l.b16 %v710
        %v914 = vunpack.c.l.b16 %v711
        %v915 = vunpack.c.l.b16 %v712
        %v916 = vunpack.c.l.b16 %v713
        %v917 = vunpack.c.l.b16 %v714
        %v918 = vunpack.c.l.b16 %v715
        %v919 = vunpack.c.l.b16 %v716
        %v920 = vunpack.c.l.b16 %v717
        %v921 = vunpack.c.l.b16 %v718
        %v922 = vunpack.c.l.b16 %v719
        %v923 = vunpack.c.l.b16 %v720
        %v924 = vunpack.c.l.b16 %v721
        %v925 = vunpack.c.l.b16 %v722
        %v926 = vunpack.c.l.b16 %v723
        %v927 = vunpack.c.l.b16 %v724
        %v928 = vunpack.c.l.b16 %v725
        %v929 = vunpack.c.l.b16 %v726
        %v930 = vunpack.c.l.b16 %v727
        %v931 = vunpack.c.l.b16 %v728
        %v932 = vunpack.c.l.b16 %v729
        %v933 = vunpack.c.l.b16 %v730
        %v934 = vunpack.c.l.b16 %v731
        %v935 = vunpack.c.l.b16 %v732
        %v936 = vunpack.c.l.b16 %v733
        %v937 = vunpack.c.l.b16 %v734
        %v938 = vunpack.c.l.b16 %v735
        %v939 = vunpack.c.l.b16 %v736
        %v940 = vpack.c.b16 %v843, %v842
        %v941 = vpack.c.b16 %v845, %v844
        %v942 = vpack.c.b16 %v847, %v846
        %v943 = vpack.c.b16 %v849, %v848
        %v944 = vpack.c.b16 %v851, %v850
        %v945 = vpack.c.b16 %v853, %v852
        %v946 = vpack.c.b16 %v855, %v854
        %v947 = vpack.c.b16 %v857, %v856
        %v948 = vpack.c.b16 %v859, %v858
        %v949 = vpack.c.b16 %v861, %v860
        %v950 = vpack.c.b16 %v863, %v862
        %v951 = vpack.c.b16 %v865, %v864
        %v952 = vpack.c.b16 %v867, %v866
        %v953 = vpack.c.b16 %v869, %v868
        %v954 = vpack.c.b16 %v871, %v870
        %v955 = vpack.c.b16 %v873, %v872
        %v956 = vpack.c.b16 %v875, %v874
        %v957 = vpack.c.b16 %v877, %v876
        %v958 = vpack.c.b16 %v879, %v878
        %v959 = vpack.c.b16 %v881, %v880
        %v960 = vpack.c.b16 %v883, %v882
        %v961 = vpack.c.b16 %v885, %v884
        %v962 = vpack.c.b16 %v887, %v886
        %v963 = vpack.c.b16 %v889, %v888
        %v964 = vpack.c.b16 %v891, %v890
        %v965 = vpack.c.b16 %v893, %v892
        %v966 = vpack.c.b16 %v895, %v894
        %v967 = vpack.c.b16 %v897, %v896
        %v968 = vpack.c.b16 %v899, %v898
        %v969 = vpack.c.b16 %v901, %v900
        %v970 = vpack.c.b16 %v903, %v902
        %v971 = vpack.c.b16 %v905, %v904
        %v972 = vpack.c.b16 %v907, %v906
        %v973 = vpack.c.b16 %v909, %v908
        %v974 = vpack.c.b16 %v911, %v910
        %v975 = vpack.c.b16 %v913, %v912
        %v976 = vpack.c.b16 %v915, %v914
        %v977 = vpack.c.b16 %v917, %v916
        %v978 = vpack.c.b16 %v919, %v918
        %v979 = vpack.c.b16 %v921, %v920
        %v980 = vpack.c.b16 %v923, %v922
        %v981 = vpack.c.b16 %v925, %v924
        %v982 = vpack.c.b16 %v927, %v926
        %v983 = vpack.c.b16 %v929, %v928
        %v984 = vpack.c.b16 %v931, %v930
        %v985 = vpack.c.b16 %v933, %v932
        %v986 = vpack.c.b16 %v935, %v934
        %v987 = vpack.c.b16 %v937, %v936
        %v988 = vpack.c.b16 %v939, %v938
        %vm1038 = vcmask 130048
        %v1040 = vsel %vm1038, %v631, 0
        %v1043 = vsel %vm1038, %v638, 0
        %1045 = vmatprep.subr.bf16.mxu0 0
        %1046 = vmatpush1.bf16.msra.mxu0 %v947
        %1047 = vmatprep.subr.bf16.mxu0 0
        %1048 = vmatpush1.bf16.msra.mxu0 %v946
        %1049 = vmatprep.subr.bf16.mxu0 0
        %1050 = vmatpush1.bf16.msra.mxu0 %v945
        %1051 = vmatprep.subr.bf16.mxu0 0
        %1052 = vmatpush1.bf16.msra.mxu0 %v944
        %1053 = vmatprep.subr.bf16.mxu0 0
        %1054 = vmatpush1.bf16.msra.mxu0 %v943
        %1055 = vmatprep.subr.bf16.mxu0 0
        %1056 = vmatpush1.bf16.msra.mxu0 %v942
        %1057 = vmatprep.subr.bf16.mxu0 0
        %1058 = vmatpush1.bf16.msra.mxu0 %v941
        %1059 = vmatprep.subr.bf16.mxu0 0
        %1060 = vmatpush1.bf16.msra.mxu0 %v940
        %1061 = vmatprep.subr.bf16.mxu0 0
        %1062 = vmatpush2.bf16.msra.mxu0 %v955
        %1063 = vmatprep.subr.bf16.mxu0 0
        %1064 = vmatpush2.bf16.msra.mxu0 %v954
        %1065 = vmatprep.subr.bf16.mxu0 0
        %1066 = vmatpush2.bf16.msra.mxu0 %v953
        %1067 = vmatprep.subr.bf16.mxu0 0
        %1068 = vmatpush2.bf16.msra.mxu0 %v952
        %1069 = vmatprep.subr.bf16.mxu0 0
        %1070 = vmatpush2.bf16.msra.mxu0 %v951
        %1071 = vmatprep.subr.bf16.mxu0 0
        %1072 = vmatpush2.bf16.msra.mxu0 %v950
        %1073 = vmatprep.subr.bf16.mxu0 0
        %1074 = vmatpush2.bf16.msra.mxu0 %v949
        %1075 = vmatprep.subr.bf16.mxu0 0
        %1076 = vmatpush2.bf16.msra.mxu0 %v948
        %1077 = vmatprep.mubr.bf16.mxu0 %v626
        %1078 = vmatmul.mubr.bf16.gmra.mxu0 %v625
        %v1079 = vpop.f32.mrf.mxu0
        %v1080 = vadd.f32 %v742, %v1079
        %v1081 = vpop.f32.mrf.mxu0
        %v1082 = vpop.f32.mrf.mxu0
        %v1083 = vadd.f32 %v742, %v1082
        %v1084 = vpop.f32.mrf.mxu0
        %1085 = vmatprep.mubr.bf16.mxu0 %v633
        %1086 = vmatmul.mubr.bf16.gmra.mxu0 %v632
        %v1087 = vpop.f32.mrf.mxu0
        %v1088 = vadd.f32 %v742, %v1087
        %v1089 = vpop.f32.mrf.mxu0
        %v1090 = vpop.f32.mrf.mxu0
        %v1091 = vadd.f32 %v742, %v1090
        %v1092 = vpop.f32.mrf.mxu0
        %1093 = vdwg.mxu0
        %1094 = vmatprep.subr.bf16.mxu0 0
        %1095 = vmatpush1.bf16.msra.mxu0 %v963
        %1096 = vmatprep.subr.bf16.mxu0 0
        %1097 = vmatpush1.bf16.msra.mxu0 %v962
        %1098 = vmatprep.subr.bf16.mxu0 0
        %1099 = vmatpush1.bf16.msra.mxu0 %v961
        %1100 = vmatprep.subr.bf16.mxu0 0
        %1101 = vmatpush1.bf16.msra.mxu0 %v960
        %1102 = vmatprep.subr.bf16.mxu0 0
        %1103 = vmatpush1.bf16.msra.mxu0 %v959
        %1104 = vmatprep.subr.bf16.mxu0 0
        %1105 = vmatpush1.bf16.msra.mxu0 %v958
        %1106 = vmatprep.subr.bf16.mxu0 0
        %1107 = vmatpush1.bf16.msra.mxu0 %v957
        %1108 = vmatprep.subr.bf16.mxu0 0
        %1109 = vmatpush1.bf16.msra.mxu0 %v956
        %1110 = vmatprep.subr.bf16.mxu0 0
        %1111 = vmatpush2.bf16.msra.mxu0 %v971
        %1112 = vmatprep.subr.bf16.mxu0 0
        %1113 = vmatpush2.bf16.msra.mxu0 %v970
        %1114 = vmatprep.subr.bf16.mxu0 0
        %1115 = vmatpush2.bf16.msra.mxu0 %v969
        %1116 = vmatprep.subr.bf16.mxu0 0
        %1117 = vmatpush2.bf16.msra.mxu0 %v968
        %1118 = vmatprep.subr.bf16.mxu0 0
        %1119 = vmatpush2.bf16.msra.mxu0 %v967
        %1120 = vmatprep.subr.bf16.mxu0 0
        %1121 = vmatpush2.bf16.msra.mxu0 %v966
        %1122 = vmatprep.subr.bf16.mxu0 0
        %1123 = vmatpush2.bf16.msra.mxu0 %v965
        %1124 = vmatprep.subr.bf16.mxu0 0
        %1125 = vmatpush2.bf16.msra.mxu0 %v964
        %1126 = vmatprep.mubr.bf16.mxu0 %v628
        %1127 = vmatmul.mubr.bf16.gmra.mxu0 %v627
        %v1128 = vpop.f32.mrf.mxu0
        %v1129 = vadd.f32 %v1080, %v1128
        %v1130 = vpop.f32.mrf.mxu0
        %v1131 = vpop.f32.mrf.mxu0
        %v1132 = vadd.f32 %v1083, %v1131
        %v1133 = vpop.f32.mrf.mxu0
        %1134 = vmatprep.mubr.bf16.mxu0 %v635
        %1135 = vmatmul.mubr.bf16.gmra.mxu0 %v634
        %v1136 = vpop.f32.mrf.mxu0
        %v1137 = vadd.f32 %v1088, %v1136
        %v1138 = vpop.f32.mrf.mxu0
        %v1139 = vpop.f32.mrf.mxu0
        %v1140 = vadd.f32 %v1091, %v1139
        %v1141 = vpop.f32.mrf.mxu0
        %1142 = vdwg.mxu0
        %1143 = vmatprep.subr.bf16.mxu0 0
        %1144 = vmatpush1.bf16.msra.mxu0 %v979
        %1145 = vmatprep.subr.bf16.mxu0 0
        %1146 = vmatpush1.bf16.msra.mxu0 %v978
        %1147 = vmatprep.subr.bf16.mxu0 0
        %1148 = vmatpush1.bf16.msra.mxu0 %v977
        %1149 = vmatprep.subr.bf16.mxu0 0
        %1150 = vmatpush1.bf16.msra.mxu0 %v976
        %1151 = vmatprep.subr.bf16.mxu0 0
        %1152 = vmatpush1.bf16.msra.mxu0 %v975
        %1153 = vmatprep.subr.bf16.mxu0 0
        %1154 = vmatpush1.bf16.msra.mxu0 %v974
        %1155 = vmatprep.subr.bf16.mxu0 0
        %1156 = vmatpush1.bf16.msra.mxu0 %v973
        %1157 = vmatprep.subr.bf16.mxu0 0
        %1158 = vmatpush1.bf16.msra.mxu0 %v972
        %1159 = vmatprep.subr.bf16.mxu0 0
        %1160 = vmatpush2.bf16.msra.mxu0 %v987
        %1161 = vmatprep.subr.bf16.mxu0 0
        %1162 = vmatpush2.bf16.msra.mxu0 %v986
        %1163 = vmatprep.subr.bf16.mxu0 0
        %1164 = vmatpush2.bf16.msra.mxu0 %v985
        %1165 = vmatprep.subr.bf16.mxu0 0
        %1166 = vmatpush2.bf16.msra.mxu0 %v984
        %1167 = vmatprep.subr.bf16.mxu0 0
        %1168 = vmatpush2.bf16.msra.mxu0 %v983
        %1169 = vmatprep.subr.bf16.mxu0 0
        %1170 = vmatpush2.bf16.msra.mxu0 %v982
        %1171 = vmatprep.subr.bf16.mxu0 0
        %1172 = vmatpush2.bf16.msra.mxu0 %v981
        %1173 = vmatprep.subr.bf16.mxu0 0
        %1174 = vmatpush2.bf16.msra.mxu0 %v980
        %1175 = vmatprep.mubr.bf16.mxu0 %v630
        %1176 = vmatmul.mubr.bf16.gmra.mxu0 %v629
        %v1177 = vpop.f32.mrf.mxu0
        %v1178 = vadd.f32 %v1129, %v1177
        %v1179 = vpop.f32.mrf.mxu0
        %v1180 = vpop.f32.mrf.mxu0
        %v1181 = vadd.f32 %v1132, %v1180
        %v1182 = vpop.f32.mrf.mxu0
        %1183 = vmatprep.mubr.bf16.mxu0 %v637
        %1184 = vmatmul.mubr.bf16.gmra.mxu0 %v636
        %v1185 = vpop.f32.mrf.mxu0
        %v1186 = vadd.f32 %v1137, %v1185
        %v1187 = vpop.f32.mrf.mxu0
        %v1188 = vpop.f32.mrf.mxu0
        %v1189 = vadd.f32 %v1140, %v1188
        %v1190 = vpop.f32.mrf.mxu0
        %1191 = vdwg.mxu0
        %1192 = vmatprep.subr.bf16.mxu0 0
        %1193 = vmatpush1.bf16.msra.mxu0 0
        %1194 = vmatprep.subr.bf16.mxu0 0
        %1195 = vmatpush1.bf16.msra.mxu0 0
        %1196 = vmatprep.subr.bf16.mxu0 0
        %1197 = vmatpush1.bf16.msra.mxu0 0
        %1198 = vmatprep.subr.bf16.mxu0 0
        %1199 = vmatpush1.bf16.msra.mxu0 0
        %1200 = vmatprep.subr.bf16.mxu0 0
        %1201 = vmatpush1.bf16.msra.mxu0 0
        %1202 = vmatprep.subr.bf16.mxu0 0
        %1203 = vmatpush1.bf16.msra.mxu0 0
        %1204 = vmatprep.subr.bf16.mxu0 0
        %1205 = vmatpush1.bf16.msra.mxu0 0
        %1206 = vmatprep.subr.bf16.mxu0 0
        %1207 = vmatpush1.bf16.msra.mxu0 %v988
        %1208 = vmatprep.subr.bf16.mxu0 0
        %1209 = vmatpush2.bf16.msra.mxu0 0
        %1210 = vmatprep.subr.bf16.mxu0 0
        %1211 = vmatpush2.bf16.msra.mxu0 0
        %1212 = vmatprep.subr.bf16.mxu0 0
        %1213 = vmatpush2.bf16.msra.mxu0 0
        %1214 = vmatprep.subr.bf16.mxu0 0
        %1215 = vmatpush2.bf16.msra.mxu0 0
        %1216 = vmatprep.subr.bf16.mxu0 0
        %1217 = vmatpush2.bf16.msra.mxu0 0
        %1218 = vmatprep.subr.bf16.mxu0 0
        %1219 = vmatpush2.bf16.msra.mxu0 0
        %1220 = vmatprep.subr.bf16.mxu0 0
        %1221 = vmatpush2.bf16.msra.mxu0 0
        %1222 = vmatprep.subr.bf16.mxu0 0
        %1223 = vmatpush2.bf16.msra.mxu0 0
        %1224 = vmatprep.mubr.bf16.mxu0 0
        %1225 = vmatmul.mubr.bf16.gmra.mxu0 %v1040
        %v1226 = vpop.f32.mrf.mxu0
        %v1227 = vadd.f32 %v1178, %v1226
        %v1228 = vpop.f32.mrf.mxu0
        %v1229 = vpop.f32.mrf.mxu0
        %v1230 = vadd.f32 %v1181, %v1229
        %v1231 = vpop.f32.mrf.mxu0
        %1232 = vmatprep.mubr.bf16.mxu0 0
        %1233 = vmatmul.mubr.bf16.gmra.mxu0 %v1043
        %v1234 = vpop.f32.mrf.mxu0
        %v1235 = vadd.f32 %v1186, %v1234
        %v1236 = vpop.f32.mrf.mxu0
        %v1237 = vpop.f32.mrf.mxu0
        %v1238 = vadd.f32 %v1189, %v1237
        %v1239 = vpop.f32.mrf.mxu0
        %1240 = vdwg.mxu0
        %v1241 = vpack.c.bf16 %v1230, %v1227
        %v1242 = vpack.c.bf16 %v1238, %v1235
        %v1243 = vtanh.bf16.pop %v1241
        %v1244 = vtanh.bf16.pop %v1242
        %v1245 = vld [vmem:[%s3] sm:$0xf]
        %v1246 = vld [vmem:[%s3 + $0x4] sm:$0xf]
        %v1247 = vld [vmem:[%s3 + $0x8] sm:$0xf]
        %v1248 = vld [vmem:[%s3 + $0xc] sm:$0xf]
        %v1249 = vld [vmem:[%s3 + $0x10] sm:$0xf]
        %v1250 = vld [vmem:[%s3 + $0x14] sm:$0xf]
        %v1251 = vld [vmem:[%s3 + $0x18] sm:$0xf]
        %v1252 = vld [vmem:[%s3 + $0x1c] sm:$0xf]
        %v1253 = vld [vmem:[%s3 + $0x20] sm:$0xf]
        %v1254 = vld [vmem:[%s3 + $0x24] sm:$0xf]
        %v1255 = vld [vmem:[%s3 + $0x28] sm:$0xf]
        %v1256 = vld [vmem:[%s3 + $0x2c] sm:$0xf]
        %v1257 = vld [vmem:[%s3 + $0x30] sm:$0xf]
        %v1258 = vld [vmem:[%s3 + $0x34] sm:$0xf]
        %v1259 = vld [vmem:[%s3 + $0x38] sm:$0xf]
        %v1260 = vld [vmem:[%s3 + $0x3c] sm:$0xf]
        %v1261 = vld [vmem:[%s4] sm:$0x1]
        %v1263 = vlaneseq
        %v1264 = vshrl.u32 %v1263, 7
        %v1265 = vsub.s32 0, %v1264
        %v1266 = vrot.slane %v1261, %v1265
        %v1284 = vunpack.c.l.b16 %v1245
        %v1285 = vunpack.c.l.b16 %v1246
        %v1286 = vunpack.c.l.b16 %v1247
        %v1287 = vunpack.c.l.b16 %v1248
        %v1288 = vunpack.c.l.b16 %v1249
        %v1289 = vunpack.c.l.b16 %v1250
        %v1290 = vunpack.c.l.b16 %v1251
        %v1291 = vunpack.c.l.b16 %v1252
        %v1292 = vunpack.c.l.b16 %v1253
        %v1293 = vunpack.c.l.b16 %v1254
        %v1294 = vunpack.c.l.b16 %v1255
        %v1295 = vunpack.c.l.b16 %v1256
        %v1296 = vunpack.c.l.b16 %v1257
        %v1297 = vunpack.c.l.b16 %v1258
        %v1298 = vunpack.c.l.b16 %v1259
        %v1299 = vunpack.c.l.b16 %v1260
        %v1300 = vpack.c.b16 %v1285, %v1284
        %v1301 = vpack.c.b16 %v1287, %v1286
        %v1302 = vpack.c.b16 %v1289, %v1288
        %v1303 = vpack.c.b16 %v1291, %v1290
        %v1304 = vpack.c.b16 %v1293, %v1292
        %v1305 = vpack.c.b16 %v1295, %v1294
        %v1306 = vpack.c.b16 %v1297, %v1296
        %v1307 = vpack.c.b16 %v1299, %v1298
        %1316 = vmatprep.subr.bf16.mxu0 0
        %1317 = vmatpush1.bf16.msra.mxu0 %v1307
        %1318 = vmatprep.subr.bf16.mxu0 0
        %1319 = vmatpush1.bf16.msra.mxu0 %v1306
        %1320 = vmatprep.subr.bf16.mxu0 0
        %1321 = vmatpush1.bf16.msra.mxu0 %v1305
        %1322 = vmatprep.subr.bf16.mxu0 0
        %1323 = vmatpush1.bf16.msra.mxu0 %v1304
        %1324 = vmatprep.subr.bf16.mxu0 0
        %1325 = vmatpush1.bf16.msra.mxu0 %v1303
        %1326 = vmatprep.subr.bf16.mxu0 0
        %1327 = vmatpush1.bf16.msra.mxu0 %v1302
        %1328 = vmatprep.subr.bf16.mxu0 0
        %1329 = vmatpush1.bf16.msra.mxu0 %v1301
        %1330 = vmatprep.subr.bf16.mxu0 0
        %1331 = vmatpush1.bf16.msra.mxu0 %v1300
        %1332 = vmatprep.subr.bf16.mxu0 0
        %1333 = vmatpush2.bf16.msra.mxu0 0
        %1334 = vmatprep.subr.bf16.mxu0 0
        %1335 = vmatpush2.bf16.msra.mxu0 0
        %1336 = vmatprep.subr.bf16.mxu0 0
        %1337 = vmatpush2.bf16.msra.mxu0 0
        %1338 = vmatprep.subr.bf16.mxu0 0
        %1339 = vmatpush2.bf16.msra.mxu0 0
        %1340 = vmatprep.subr.bf16.mxu0 0
        %1341 = vmatpush2.bf16.msra.mxu0 0
        %1342 = vmatprep.subr.bf16.mxu0 0
        %1343 = vmatpush2.bf16.msra.mxu0 0
        %1344 = vmatprep.subr.bf16.mxu0 0
        %1345 = vmatpush2.bf16.msra.mxu0 0
        %1346 = vmatprep.subr.bf16.mxu0 0
        %1347 = vmatpush2.bf16.msra.mxu0 0
        %1348 = vmatprep.mubr.bf16.mxu0 0
        %1349 = vmatmul.mubr.bf16.gmra.mxu0 %v1243
        %v1350 = vpop.f32.mrf.mxu0
        %v1351 = vadd.f32 %v1266, %v1350
        %v1352 = vpop.f32.mrf.mxu0
        %v1353 = vpop.f32.mrf.mxu0
        %v1354 = vadd.f32 %v1266, %v1353
        %v1355 = vpop.f32.mrf.mxu0
        %1356 = vmatprep.mubr.bf16.mxu0 0
        %1357 = vmatmul.mubr.bf16.gmra.mxu0 %v1244
        %v1358 = vpop.f32.mrf.mxu0
        %v1359 = vadd.f32 %v1266, %v1358
        %v1360 = vpop.f32.mrf.mxu0
        %v1361 = vpop.f32.mrf.mxu0
        %v1362 = vadd.f32 %v1266, %v1361
        %v1363 = vpop.f32.mrf.mxu0
        %1364 = vdwg.mxu0
        %v1365 = vpack.c.bf16 %v1354, %v1351
        %v1366 = vpack.c.bf16 %v1362, %v1359
        %v1367 = vtanh.bf16.pop %v1365
        %v1368 = vtanh.bf16.pop %v1366
        %v1369 = vld [vmem:[%s5] sm:$0xf]
        %v1370 = vld [vmem:[%s5 + $0x4] sm:$0xf]
        %v1371 = vld [vmem:[%s5 + $0x8] sm:$0xf]
        %v1372 = vld [vmem:[%s5 + $0xc] sm:$0xf]
        %v1373 = vld [vmem:[%s5 + $0x10] sm:$0xf]
        %v1374 = vld [vmem:[%s5 + $0x14] sm:$0xf]
        %v1375 = vld [vmem:[%s5 + $0x18] sm:$0xf]
        %v1376 = vld [vmem:[%s5 + $0x1c] sm:$0xf]
        %v1377 = vld [vmem:[%s6] sm:$0x1]
        %v1379 = vlaneseq
        %v1380 = vshrl.u32 %v1379, 7
        %v1381 = vsub.s32 0, %v1380
        %v1382 = vrot.slane %v1377, %v1381
        %v1392 = vunpack.c.l.b16 %v1369
        %v1393 = vunpack.c.l.b16 %v1370
        %v1394 = vunpack.c.l.b16 %v1371
        %v1395 = vunpack.c.l.b16 %v1372
        %v1396 = vunpack.c.l.b16 %v1373
        %v1397 = vunpack.c.l.b16 %v1374
        %v1398 = vunpack.c.l.b16 %v1375
        %v1399 = vunpack.c.l.b16 %v1376
        %v1400 = vpack.c.b16 %v1393, %v1392
        %v1401 = vpack.c.b16 %v1395, %v1394
        %v1402 = vpack.c.b16 %v1397, %v1396
        %v1403 = vpack.c.b16 %v1399, %v1398
        %vm1408 = vcmask 523264
        %v1410 = vsel %vm1408, %v1367, 0
        %v1413 = vsel %vm1408, %v1368, 0
        %1415 = vmatprep.subr.bf16.mxu0 0
        %1416 = vmatpush1.bf16.msra.mxu0 0
        %1417 = vmatprep.subr.bf16.mxu0 0
        %1418 = vmatpush1.bf16.msra.mxu0 0
        %1419 = vmatprep.subr.bf16.mxu0 0
        %1420 = vmatpush1.bf16.msra.mxu0 0
        %1421 = vmatprep.subr.bf16.mxu0 0
        %1422 = vmatpush1.bf16.msra.mxu0 0
        %1423 = vmatprep.subr.bf16.mxu0 0
        %1424 = vmatpush1.bf16.msra.mxu0 %v1403
        %1425 = vmatprep.subr.bf16.mxu0 0
        %1426 = vmatpush1.bf16.msra.mxu0 %v1402
        %1427 = vmatprep.subr.bf16.mxu0 0
        %1428 = vmatpush1.bf16.msra.mxu0 %v1401
        %1429 = vmatprep.subr.bf16.mxu0 0
        %1430 = vmatpush1.bf16.msra.mxu0 %v1400
        %1431 = vmatprep.subr.bf16.mxu0 0
        %1432 = vmatpush2.bf16.msra.mxu0 0
        %1433 = vmatprep.subr.bf16.mxu0 0
        %1434 = vmatpush2.bf16.msra.mxu0 0
        %1435 = vmatprep.subr.bf16.mxu0 0
        %1436 = vmatpush2.bf16.msra.mxu0 0
        %1437 = vmatprep.subr.bf16.mxu0 0
        %1438 = vmatpush2.bf16.msra.mxu0 0
        %1439 = vmatprep.subr.bf16.mxu0 0
        %1440 = vmatpush2.bf16.msra.mxu0 0
        %1441 = vmatprep.subr.bf16.mxu0 0
        %1442 = vmatpush2.bf16.msra.mxu0 0
        %1443 = vmatprep.subr.bf16.mxu0 0
        %1444 = vmatpush2.bf16.msra.mxu0 0
        %1445 = vmatprep.subr.bf16.mxu0 0
        %1446 = vmatpush2.bf16.msra.mxu0 0
        %1447 = vmatprep.mubr.bf16.mxu0 0
        %1448 = vmatmul.mubr.bf16.gmra.mxu0 %v1410
        %v1449 = vpop.f32.mrf.mxu0
        %v1450 = vadd.f32 %v1382, %v1449
        %v1451 = vpop.f32.mrf.mxu0
        %v1452 = vpop.f32.mrf.mxu0
        %v1453 = vadd.f32 %v1382, %v1452
        %v1454 = vpop.f32.mrf.mxu0
        %1455 = vmatprep.mubr.bf16.mxu0 0
        %1456 = vmatmul.mubr.bf16.gmra.mxu0 %v1413
        %v1457 = vpop.f32.mrf.mxu0
        %v1458 = vadd.f32 %v1382, %v1457
        %v1459 = vpop.f32.mrf.mxu0
        %v1460 = vpop.f32.mrf.mxu0
        %v1461 = vadd.f32 %v1382, %v1460
        %v1462 = vpop.f32.mrf.mxu0
        %1463 = vdwg.mxu0
        %v1464 = vpack.c.bf16 %v1453, %v1450
        %v1465 = vpack.c.bf16 %v1461, %v1458
        %v1466 = vtanh.bf16.pop %v1464
        %v1467 = vtanh.bf16.pop %v1465
        %v1468 = vld [vmem:[%s7] sm:$0xf]
        %v1469 = vld [vmem:[%s7 + $0x4] sm:$0x3]
        %v1470 = vld [vmem:[%s8] sm:$0x1]
        %v1472 = vlaneseq
        %v1473 = vshrl.u32 %v1472, 7
        %v1474 = vsub.s32 0, %v1473
        %v1475 = vrot.slane %v1470, %v1474
        %v1479 = vunpack.c.l.b16 %v1468
        %v1480 = vunpack.c.l.b16 %v1469
        %v1481 = vpack.c.b16 %v1480, %v1479
        %vm1482 = vcmask 97280
        %v1484 = vsel %vm1482, %v1466, 0
        %v1487 = vsel %vm1482, %v1467, 0
        %vm1489 = vcmask 1045504
        %v1491 = vsel %vm1489, %v1481, 0
        %1493 = vmatprep.subr.bf16.mxu0 0
        %1494 = vmatpush1.bf16.msra.mxu0 0
        %1495 = vmatprep.subr.bf16.mxu0 0
        %1496 = vmatpush1.bf16.msra.mxu0 0
        %1497 = vmatprep.subr.bf16.mxu0 0
        %1498 = vmatpush1.bf16.msra.mxu0 0
        %1499 = vmatprep.subr.bf16.mxu0 0
        %1500 = vmatpush1.bf16.msra.mxu0 0
        %1501 = vmatprep.subr.bf16.mxu0 0
        %1502 = vmatpush1.bf16.msra.mxu0 0
        %1503 = vmatprep.subr.bf16.mxu0 0
        %1504 = vmatpush1.bf16.msra.mxu0 0
        %1505 = vmatprep.subr.bf16.mxu0 0
        %1506 = vmatpush1.bf16.msra.mxu0 0
        %1507 = vmatprep.subr.bf16.mxu0 0
        %1508 = vmatpush1.bf16.msra.mxu0 %v1491
        %1509 = vmatprep.subr.bf16.mxu0 0
        %1510 = vmatpush2.bf16.msra.mxu0 0
        %1511 = vmatprep.subr.bf16.mxu0 0
        %1512 = vmatpush2.bf16.msra.mxu0 0
        %1513 = vmatprep.subr.bf16.mxu0 0
        %1514 = vmatpush2.bf16.msra.mxu0 0
        %1515 = vmatprep.subr.bf16.mxu0 0
        %1516 = vmatpush2.bf16.msra.mxu0 0
        %1517 = vmatprep.subr.bf16.mxu0 0
        %1518 = vmatpush2.bf16.msra.mxu0 0
        %1519 = vmatprep.subr.bf16.mxu0 0
        %1520 = vmatpush2.bf16.msra.mxu0 0
        %1521 = vmatprep.subr.bf16.mxu0 0
        %1522 = vmatpush2.bf16.msra.mxu0 0
        %1523 = vmatprep.subr.bf16.mxu0 0
        %1524 = vmatpush2.bf16.msra.mxu0 0
        %1525 = vmatprep.mubr.bf16.mxu0 0
        %1526 = vmatmul.mubr.bf16.gmra.mxu0 %v1484
        %v1527 = vpop.f32.mrf.mxu0
        %v1528 = vadd.f32 %v1475, %v1527
        %v1529 = vpop.f32.mrf.mxu0
        %v1530 = vpop.f32.mrf.mxu0
        %v1531 = vadd.f32 %v1475, %v1530
        %v1532 = vpop.f32.mrf.mxu0
        %1533 = vmatprep.mubr.bf16.mxu0 0
        %1534 = vmatmul.mubr.bf16.gmra.mxu0 %v1487
        %v1535 = vpop.f32.mrf.mxu0
        %v1536 = vadd.f32 %v1475, %v1535
        %v1537 = vpop.f32.mrf.mxu0
        %v1538 = vpop.f32.mrf.mxu0
        %v1539 = vadd.f32 %v1475, %v1538
        %v1540 = vpop.f32.mrf.mxu0
        %1541 = vdwg.mxu0
        %vm1542 = vcmask 23552
        %1543 = vst.msk [vmem:[%s591] sm:$0xff] %vm1542, %v1528
        %1544 = vst.msk [vmem:[%s591 + $0x8] sm:$0xff] %vm1542, %v1531
        %1545 = vst.msk [vmem:[%s591 + $0x10] sm:$0xff] %vm1542, %v1536
        %1546 = vst.msk [vmem:[%s591 + $0x18] sm:$0xff] %vm1542, %v1539
        %v1547 = vpack.c.bf16 %v1531, %v1528
        %v1548 = vpack.c.bf16 %v1539, %v1536
        %v1549 = vld [vmem:[%s9] sm:$0x3]
        %v1550 = vld [vmem:[%s10] sm:$0x1]
        %v1552 = vlaneseq
        %v1553 = vshrl.u32 %v1552, 7
        %v1554 = vsub.s32 0, %v1553
        %v1555 = vrot.slane %v1550, %v1554
        %v1558 = vsel %vm1542, %v1547, 0
        %v1561 = vsel %vm1542, %v1548, 0
        %vm1563 = vcmask 1040384
        %vm1564 = vcmask 1041408
        %v1565 = vsel %vm1563, 4294967295, 65535
        %v1566 = vsel %vm1564, %v1565, 0
        %v1568 = vand.u32 %v1549, %v1566
        %1570 = vmatprep.subr.bf16.mxu0 0
        %1571 = vmatpush1.bf16.msra.mxu0 0
        %1572 = vmatprep.subr.bf16.mxu0 0
        %1573 = vmatpush1.bf16.msra.mxu0 0
        %1574 = vmatprep.subr.bf16.mxu0 0
        %1575 = vmatpush1.bf16.msra.mxu0 0
        %1576 = vmatprep.subr.bf16.mxu0 0
        %1577 = vmatpush1.bf16.msra.mxu0 0
        %1578 = vmatprep.subr.bf16.mxu0 0
        %1579 = vmatpush1.bf16.msra.mxu0 0
        %1580 = vmatprep.subr.bf16.mxu0 0
        %1581 = vmatpush1.bf16.msra.mxu0 0
        %1582 = vmatprep.subr.bf16.mxu0 0
        %1583 = vmatpush1.bf16.msra.mxu0 0
        %1584 = vmatprep.subr.bf16.mxu0 0
        %1585 = vmatpush1.bf16.msra.mxu0 %v1568
        %1586 = vmatprep.subr.bf16.mxu0 0
        %1587 = vmatpush2.bf16.msra.mxu0 0
        %1588 = vmatprep.subr.bf16.mxu0 0
        %1589 = vmatpush2.bf16.msra.mxu0 0
        %1590 = vmatprep.subr.bf16.mxu0 0
        %1591 = vmatpush2.bf16.msra.mxu0 0
        %1592 = vmatprep.subr.bf16.mxu0 0
        %1593 = vmatpush2.bf16.msra.mxu0 0
        %1594 = vmatprep.subr.bf16.mxu0 0
        %1595 = vmatpush2.bf16.msra.mxu0 0
        %1596 = vmatprep.subr.bf16.mxu0 0
        %1597 = vmatpush2.bf16.msra.mxu0 0
        %1598 = vmatprep.subr.bf16.mxu0 0
        %1599 = vmatpush2.bf16.msra.mxu0 0
        %1600 = vmatprep.subr.bf16.mxu0 0
        %1601 = vmatpush2.bf16.msra.mxu0 0
        %1602 = vmatprep.mubr.bf16.mxu0 0
        %1603 = vmatmul.mubr.bf16.gmra.mxu0 %v1558
        %v1604 = vpop.f32.mrf.mxu0
        %v1605 = vadd.f32 %v1555, %v1604
        %v1606 = vpop.f32.mrf.mxu0
        %v1607 = vpop.f32.mrf.mxu0
        %v1608 = vadd.f32 %v1555, %v1607
        %v1609 = vpop.f32.mrf.mxu0
        %1610 = vmatprep.mubr.bf16.mxu0 0
        %1611 = vmatmul.mubr.bf16.gmra.mxu0 %v1561
        %v1612 = vpop.f32.mrf.mxu0
        %v1613 = vadd.f32 %v1555, %v1612
        %v1614 = vpop.f32.mrf.mxu0
        %v1615 = vpop.f32.mrf.mxu0
        %v1616 = vadd.f32 %v1555, %v1615
        %v1617 = vpop.f32.mrf.mxu0
        %1618 = vdwg.mxu0
        %v1619 = vpack.c.bf16 %v1608, %v1605
        %v1620 = vpack.c.bf16 %v1616, %v1613
        %v1621 = vtanh.bf16.pop %v1619
        %v1622 = vtanh.bf16.pop %v1620
        %v1623 = vld [vmem:[%s11] sm:$0xf]
        %v1624 = vld [vmem:[%s11 + $0x4] sm:$0x3]
        %v1625 = vld [vmem:[%s12] sm:$0x1]
        %v1627 = vlaneseq
        %v1628 = vshrl.u32 %v1627, 7
        %v1629 = vsub.s32 0, %v1628
        %v1630 = vrot.slane %v1625, %v1629
        %v1634 = vunpack.c.l.b16 %v1623
        %v1635 = vunpack.c.l.b16 %v1624
        %v1636 = vpack.c.b16 %v1635, %v1634
        %v1638 = vsel %vm1482, %v1621, 0
        %v1641 = vsel %vm1482, %v1622, 0
        %v1644 = vsel %vm1489, %v1636, 0
        %1646 = vmatprep.subr.bf16.mxu0 0
        %1647 = vmatpush1.bf16.msra.mxu0 0
        %1648 = vmatprep.subr.bf16.mxu0 0
        %1649 = vmatpush1.bf16.msra.mxu0 0
        %1650 = vmatprep.subr.bf16.mxu0 0
        %1651 = vmatpush1.bf16.msra.mxu0 0
        %1652 = vmatprep.subr.bf16.mxu0 0
        %1653 = vmatpush1.bf16.msra.mxu0 0
        %1654 = vmatprep.subr.bf16.mxu0 0
        %1655 = vmatpush1.bf16.msra.mxu0 0
        %1656 = vmatprep.subr.bf16.mxu0 0
        %1657 = vmatpush1.bf16.msra.mxu0 0
        %1658 = vmatprep.subr.bf16.mxu0 0
        %1659 = vmatpush1.bf16.msra.mxu0 0
        %1660 = vmatprep.subr.bf16.mxu0 0
        %1661 = vmatpush1.bf16.msra.mxu0 %v1644
        %1662 = vmatprep.subr.bf16.mxu0 0
        %1663 = vmatpush2.bf16.msra.mxu0 0
        %1664 = vmatprep.subr.bf16.mxu0 0
        %1665 = vmatpush2.bf16.msra.mxu0 0
        %1666 = vmatprep.subr.bf16.mxu0 0
        %1667 = vmatpush2.bf16.msra.mxu0 0
        %1668 = vmatprep.subr.bf16.mxu0 0
        %1669 = vmatpush2.bf16.msra.mxu0 0
        %1670 = vmatprep.subr.bf16.mxu0 0
        %1671 = vmatpush2.bf16.msra.mxu0 0
        %1672 = vmatprep.subr.bf16.mxu0 0
        %1673 = vmatpush2.bf16.msra.mxu0 0
        %1674 = vmatprep.subr.bf16.mxu0 0
        %1675 = vmatpush2.bf16.msra.mxu0 0
        %1676 = vmatprep.subr.bf16.mxu0 0
        %1677 = vmatpush2.bf16.msra.mxu0 0
        %1678 = vmatprep.mubr.bf16.mxu0 0
        %1679 = vmatmul.mubr.bf16.gmra.mxu0 %v1638
        %v1680 = vpop.f32.mrf.mxu0
        %v1681 = vadd.f32 %v1630, %v1680
        %v1682 = vpop.f32.mrf.mxu0
        %v1683 = vpop.f32.mrf.mxu0
        %v1684 = vadd.f32 %v1630, %v1683
        %v1685 = vpop.f32.mrf.mxu0
        %1686 = vmatprep.mubr.bf16.mxu0 0
        %1687 = vmatmul.mubr.bf16.gmra.mxu0 %v1641
        %v1688 = vpop.f32.mrf.mxu0
        %v1689 = vadd.f32 %v1630, %v1688
        %v1690 = vpop.f32.mrf.mxu0
        %v1691 = vpop.f32.mrf.mxu0
        %v1692 = vadd.f32 %v1630, %v1691
        %v1693 = vpop.f32.mrf.mxu0
        %1694 = vdwg.mxu0
        %v1695 = vpack.c.bf16 %v1684, %v1681
        %v1696 = vpack.c.bf16 %v1692, %v1689
        %v1697 = vtanh.bf16.pop %v1695
        %v1698 = vtanh.bf16.pop %v1696
        %v1699 = vld [vmem:[%s13] sm:$0xf]
        %v1700 = vld [vmem:[%s13 + $0x4] sm:$0xf]
        %v1701 = vld [vmem:[%s13 + $0x8] sm:$0xf]
        %v1702 = vld [vmem:[%s13 + $0xc] sm:$0xf]
        %v1703 = vld [vmem:[%s13 + $0x10] sm:$0xf]
        %v1704 = vld [vmem:[%s13 + $0x14] sm:$0xf]
        %v1705 = vld [vmem:[%s13 + $0x18] sm:$0xf]
        %v1706 = vld [vmem:[%s13 + $0x1c] sm:$0xf]
        %v1707 = vld [vmem:[%s14] sm:$0x1]
        %v1709 = vlaneseq
        %v1710 = vshrl.u32 %v1709, 7
        %v1711 = vsub.s32 0, %v1710
        %v1712 = vrot.slane %v1707, %v1711
        %v1722 = vunpack.c.l.b16 %v1699
        %v1723 = vunpack.c.l.b16 %v1700
        %v1724 = vunpack.c.l.b16 %v1701
        %v1725 = vunpack.c.l.b16 %v1702
        %v1726 = vunpack.c.l.b16 %v1703
        %v1727 = vunpack.c.l.b16 %v1704
        %v1728 = vunpack.c.l.b16 %v1705
        %v1729 = vunpack.c.l.b16 %v1706
        %v1730 = vpack.c.b16 %v1723, %v1722
        %v1731 = vpack.c.b16 %v1725, %v1724
        %v1732 = vpack.c.b16 %v1727, %v1726
        %v1733 = vpack.c.b16 %v1729, %v1728
        %v1739 = vsel %vm1408, %v1697, 0
        %v1742 = vsel %vm1408, %v1698, 0
        %1744 = vmatprep.subr.bf16.mxu0 0
        %1745 = vmatpush1.bf16.msra.mxu0 0
        %1746 = vmatprep.subr.bf16.mxu0 0
        %1747 = vmatpush1.bf16.msra.mxu0 0
        %1748 = vmatprep.subr.bf16.mxu0 0
        %1749 = vmatpush1.bf16.msra.mxu0 0
        %1750 = vmatprep.subr.bf16.mxu0 0
        %1751 = vmatpush1.bf16.msra.mxu0 0
        %1752 = vmatprep.subr.bf16.mxu0 0
        %1753 = vmatpush1.bf16.msra.mxu0 %v1733
        %1754 = vmatprep.subr.bf16.mxu0 0
        %1755 = vmatpush1.bf16.msra.mxu0 %v1732
        %1756 = vmatprep.subr.bf16.mxu0 0
        %1757 = vmatpush1.bf16.msra.mxu0 %v1731
        %1758 = vmatprep.subr.bf16.mxu0 0
        %1759 = vmatpush1.bf16.msra.mxu0 %v1730
        %1760 = vmatprep.subr.bf16.mxu0 0
        %1761 = vmatpush2.bf16.msra.mxu0 0
        %1762 = vmatprep.subr.bf16.mxu0 0
        %1763 = vmatpush2.bf16.msra.mxu0 0
        %1764 = vmatprep.subr.bf16.mxu0 0
        %1765 = vmatpush2.bf16.msra.mxu0 0
        %1766 = vmatprep.subr.bf16.mxu0 0
        %1767 = vmatpush2.bf16.msra.mxu0 0
        %1768 = vmatprep.subr.bf16.mxu0 0
        %1769 = vmatpush2.bf16.msra.mxu0 0
        %1770 = vmatprep.subr.bf16.mxu0 0
        %1771 = vmatpush2.bf16.msra.mxu0 0
        %1772 = vmatprep.subr.bf16.mxu0 0
        %1773 = vmatpush2.bf16.msra.mxu0 0
        %1774 = vmatprep.subr.bf16.mxu0 0
        %1775 = vmatpush2.bf16.msra.mxu0 0
        %1776 = vmatprep.mubr.bf16.mxu0 0
        %1777 = vmatmul.mubr.bf16.gmra.mxu0 %v1739
        %v1778 = vpop.f32.mrf.mxu0
        %v1779 = vadd.f32 %v1712, %v1778
        %v1780 = vpop.f32.mrf.mxu0
        %v1781 = vpop.f32.mrf.mxu0
        %v1782 = vadd.f32 %v1712, %v1781
        %v1783 = vpop.f32.mrf.mxu0
        %1784 = vmatprep.mubr.bf16.mxu0 0
        %1785 = vmatmul.mubr.bf16.gmra.mxu0 %v1742
        %v1786 = vpop.f32.mrf.mxu0
        %v1787 = vadd.f32 %v1712, %v1786
        %v1788 = vpop.f32.mrf.mxu0
        %v1789 = vpop.f32.mrf.mxu0
        %v1790 = vadd.f32 %v1712, %v1789
        %v1791 = vpop.f32.mrf.mxu0
        %1792 = vdwg.mxu0
        %v1793 = vpack.c.bf16 %v1782, %v1779
        %v1794 = vpack.c.bf16 %v1790, %v1787
        %v1795 = vtanh.bf16.pop %v1793
        %v1796 = vtanh.bf16.pop %v1794
        %v1797 = vld [vmem:[%s15] sm:$0xff]
        %v1798 = vld [vmem:[%s15 + $0x8] sm:$0xff]
        %v1799 = vld [vmem:[%s15 + $0x10] sm:$0xff]
        %v1800 = vld [vmem:[%s15 + $0x18] sm:$0xf]
        %v1801 = vld [vmem:[%s15 + $0x1c] sm:$0xff]
        %v1802 = vld [vmem:[%s15 + $0x24] sm:$0xff]
        %v1803 = vld [vmem:[%s15 + $0x2c] sm:$0xff]
        %v1804 = vld [vmem:[%s15 + $0x34] sm:$0xf]
        %v1805 = vld [vmem:[%s15 + $0x38] sm:$0xff]
        %v1806 = vld [vmem:[%s15 + $0x40] sm:$0xff]
        %v1807 = vld [vmem:[%s15 + $0x48] sm:$0xff]
        %v1808 = vld [vmem:[%s15 + $0x50] sm:$0xf]
        %v1809 = vld [vmem:[%s15 + $0x54] sm:$0xff]
        %v1810 = vld [vmem:[%s15 + $0x5c] sm:$0xff]
        %v1811 = vld [vmem:[%s15 + $0x64] sm:$0xff]
        %v1812 = vld [vmem:[%s15 + $0x6c] sm:$0xf]
        %v1813 = vld [vmem:[%s15 + $0x70] sm:$0xff]
        %v1814 = vld [vmem:[%s15 + $0x78] sm:$0xff]
        %v1815 = vld [vmem:[%s15 + $0x80] sm:$0xff]
        %v1816 = vld [vmem:[%s15 + $0x88] sm:$0xf]
        %v1817 = vld [vmem:[%s15 + $0x8c] sm:$0xff]
        %v1818 = vld [vmem:[%s15 + $0x94] sm:$0xff]
        %v1819 = vld [vmem:[%s15 + $0x9c] sm:$0xff]
        %v1820 = vld [vmem:[%s15 + $0xa4] sm:$0xf]
        %v1821 = vld [vmem:[%s15 + $0xa8] sm:$0xff]
        %v1822 = vld [vmem:[%s15 + $0xb0] sm:$0xff]
        %v1823 = vld [vmem:[%s15 + $0xb8] sm:$0xff]
        %v1824 = vld [vmem:[%s15 + $0xc0] sm:$0xf]
        %v1825 = vld [vmem:[%s15 + $0xc4] sm:$0xff]
        %v1826 = vld [vmem:[%s15 + $0xcc] sm:$0xff]
        %v1827 = vld [vmem:[%s15 + $0xd4] sm:$0xff]
        %v1828 = vld [vmem:[%s15 + $0xdc] sm:$0xf]
        %v1829 = vld [vmem:[%s15 + $0xe0] sm:$0xff]
        %v1830 = vld [vmem:[%s15 + $0xe8] sm:$0xff]
        %v1831 = vld [vmem:[%s15 + $0xf0] sm:$0xff]
        %v1832 = vld [vmem:[%s15 + $0xf8] sm:$0xf]
        %v1833 = vld [vmem:[%s15 + $0xfc] sm:$0xff]
        %v1834 = vld [vmem:[%s15 + $0x104] sm:$0xff]
        %v1835 = vld [vmem:[%s15 + $0x10c] sm:$0xff]
        %v1836 = vld [vmem:[%s15 + $0x114] sm:$0xf]
        %v1837 = vld [vmem:[%s15 + $0x118] sm:$0xff]
        %v1838 = vld [vmem:[%s15 + $0x120] sm:$0xff]
        %v1839 = vld [vmem:[%s15 + $0x128] sm:$0xff]
        %v1840 = vld [vmem:[%s15 + $0x130] sm:$0xf]
        %v1841 = vld [vmem:[%s15 + $0x134] sm:$0xff]
        %v1842 = vld [vmem:[%s15 + $0x13c] sm:$0xff]
        %v1843 = vld [vmem:[%s15 + $0x144] sm:$0xff]
        %v1844 = vld [vmem:[%s15 + $0x14c] sm:$0xf]
        %v1845 = vld [vmem:[%s15 + $0x150] sm:$0xff]
        %v1846 = vld [vmem:[%s15 + $0x158] sm:$0xff]
        %v1847 = vld [vmem:[%s15 + $0x160] sm:$0xff]
        %v1848 = vld [vmem:[%s15 + $0x168] sm:$0xf]
        %v1849 = vld [vmem:[%s15 + $0x16c] sm:$0xff]
        %v1850 = vld [vmem:[%s15 + $0x174] sm:$0xff]
        %v1851 = vld [vmem:[%s15 + $0x17c] sm:$0xff]
        %v1852 = vld [vmem:[%s15 + $0x184] sm:$0xf]
        %v1853 = vld [vmem:[%s15 + $0x188] sm:$0xff]
        %v1854 = vld [vmem:[%s15 + $0x190] sm:$0xff]
        %v1855 = vld [vmem:[%s15 + $0x198] sm:$0xff]
        %v1856 = vld [vmem:[%s15 + $0x1a0] sm:$0xf]
        %v1857 = vld [vmem:[%s15 + $0x1a4] sm:$0xff]
        %v1858 = vld [vmem:[%s15 + $0x1ac] sm:$0xff]
        %v1859 = vld [vmem:[%s15 + $0x1b4] sm:$0xff]
        %v1860 = vld [vmem:[%s15 + $0x1bc] sm:$0xf]
        %v1861 = vld [vmem:[%s16] sm:$0x7f]
        %v1863 = vlaneseq
        %v1864 = vshrl.u32 %v1863, 7
        %v1865 = vsub.s32 0, %v1864
        %v1866 = vrot.slane %v1861, %v1865
        %v1867 = vlaneseq
        %v1868 = vshrl.u32 %v1867, 7
        %v1869 = vsub.s32 1, %v1868
        %v1870 = vrot.slane %v1861, %v1869
        %v1871 = vlaneseq
        %v1872 = vshrl.u32 %v1871, 7
        %v1873 = vsub.s32 2, %v1872
        %v1874 = vrot.slane %v1861, %v1873
        %v1875 = vlaneseq
        %v1876 = vshrl.u32 %v1875, 7
        %v1877 = vsub.s32 3, %v1876
        %v1878 = vrot.slane %v1861, %v1877
        %v1879 = vlaneseq
        %v1880 = vshrl.u32 %v1879, 7
        %v1881 = vsub.s32 4, %v1880
        %v1882 = vrot.slane %v1861, %v1881
        %v1883 = vlaneseq
        %v1884 = vshrl.u32 %v1883, 7
        %v1885 = vsub.s32 5, %v1884
        %v1886 = vrot.slane %v1861, %v1885
        %v1887 = vlaneseq
        %v1888 = vshrl.u32 %v1887, 7
        %v1889 = vsub.s32 6, %v1888
        %v1890 = vrot.slane %v1861, %v1889
        %v1962 = vunpack.c.l.b16 %v1797
        %v1963 = vunpack.c.h.b16 %v1797
        %v1964 = vunpack.c.l.b16 %v1798
        %v1965 = vunpack.c.h.b16 %v1798
        %v1966 = vunpack.c.l.b16 %v1799
        %v1967 = vunpack.c.h.b16 %v1799
        %v1968 = vunpack.c.l.b16 %v1800
        %v1969 = vunpack.c.l.b16 %v1801
        %v1970 = vunpack.c.h.b16 %v1801
        %v1971 = vunpack.c.l.b16 %v1802
        %v1972 = vunpack.c.h.b16 %v1802
        %v1973 = vunpack.c.l.b16 %v1803
        %v1974 = vunpack.c.h.b16 %v1803
        %v1975 = vunpack.c.l.b16 %v1804
        %v1976 = vunpack.c.l.b16 %v1805
        %v1977 = vunpack.c.h.b16 %v1805
        %v1978 = vunpack.c.l.b16 %v1806
        %v1979 = vunpack.c.h.b16 %v1806
        %v1980 = vunpack.c.l.b16 %v1807
        %v1981 = vunpack.c.h.b16 %v1807
        %v1982 = vunpack.c.l.b16 %v1808
        %v1983 = vunpack.c.l.b16 %v1809
        %v1984 = vunpack.c.h.b16 %v1809
        %v1985 = vunpack.c.l.b16 %v1810
        %v1986 = vunpack.c.h.b16 %v1810
        %v1987 = vunpack.c.l.b16 %v1811
        %v1988 = vunpack.c.h.b16 %v1811
        %v1989 = vunpack.c.l.b16 %v1812
        %v1990 = vunpack.c.l.b16 %v1813
        %v1991 = vunpack.c.h.b16 %v1813
        %v1992 = vunpack.c.l.b16 %v1814
        %v1993 = vunpack.c.h.b16 %v1814
        %v1994 = vunpack.c.l.b16 %v1815
        %v1995 = vunpack.c.h.b16 %v1815
        %v1996 = vunpack.c.l.b16 %v1816
        %v1997 = vunpack.c.l.b16 %v1817
        %v1998 = vunpack.c.h.b16 %v1817
        %v1999 = vunpack.c.l.b16 %v1818
        %v2000 = vunpack.c.h.b16 %v1818
        %v2001 = vunpack.c.l.b16 %v1819
        %v2002 = vunpack.c.h.b16 %v1819
        %v2003 = vunpack.c.l.b16 %v1820
        %v2004 = vunpack.c.l.b16 %v1821
        %v2005 = vunpack.c.h.b16 %v1821
        %v2006 = vunpack.c.l.b16 %v1822
        %v2007 = vunpack.c.h.b16 %v1822
        %v2008 = vunpack.c.l.b16 %v1823
        %v2009 = vunpack.c.h.b16 %v1823
        %v2010 = vunpack.c.l.b16 %v1824
        %v2011 = vunpack.c.l.b16 %v1825
        %v2012 = vunpack.c.h.b16 %v1825
        %v2013 = vunpack.c.l.b16 %v1826
        %v2014 = vunpack.c.h.b16 %v1826
        %v2015 = vunpack.c.l.b16 %v1827
        %v2016 = vunpack.c.h.b16 %v1827
        %v2017 = vunpack.c.l.b16 %v1828
        %v2018 = vunpack.c.l.b16 %v1829
        %v2019 = vunpack.c.h.b16 %v1829
        %v2020 = vunpack.c.l.b16 %v1830
        %v2021 = vunpack.c.h.b16 %v1830
        %v2022 = vunpack.c.l.b16 %v1831
        %v2023 = vunpack.c.h.b16 %v1831
        %v2024 = vunpack.c.l.b16 %v1832
        %v2025 = vunpack.c.l.b16 %v1833
        %v2026 = vunpack.c.h.b16 %v1833
        %v2027 = vunpack.c.l.b16 %v1834
        %v2028 = vunpack.c.h.b16 %v1834
        %v2029 = vunpack.c.l.b16 %v1835
        %v2030 = vunpack.c.h.b16 %v1835
        %v2031 = vunpack.c.l.b16 %v1836
        %v2032 = vunpack.c.l.b16 %v1837
        %v2033 = vunpack.c.h.b16 %v1837
        %v2034 = vunpack.c.l.b16 %v1838
        %v2035 = vunpack.c.h.b16 %v1838
        %v2036 = vunpack.c.l.b16 %v1839
        %v2037 = vunpack.c.h.b16 %v1839
        %v2038 = vunpack.c.l.b16 %v1840
        %v2039 = vunpack.c.l.b16 %v1841
        %v2040 = vunpack.c.h.b16 %v1841
        %v2041 = vunpack.c.l.b16 %v1842
        %v2042 = vunpack.c.h.b16 %v1842
        %v2043 = vunpack.c.l.b16 %v1843
        %v2044 = vunpack.c.h.b16 %v1843
        %v2045 = vunpack.c.l.b16 %v1844
        %v2046 = vunpack.c.l.b16 %v1845
        %v2047 = vunpack.c.h.b16 %v1845
        %v2048 = vunpack.c.l.b16 %v1846
        %v2049 = vunpack.c.h.b16 %v1846
        %v2050 = vunpack.c.l.b16 %v1847
        %v2051 = vunpack.c.h.b16 %v1847
        %v2052 = vunpack.c.l.b16 %v1848
        %v2053 = vunpack.c.l.b16 %v1849
        %v2054 = vunpack.c.h.b16 %v1849
        %v2055 = vunpack.c.l.b16 %v1850
        %v2056 = vunpack.c.h.b16 %v1850
        %v2057 = vunpack.c.l.b16 %v1851
        %v2058 = vunpack.c.h.b16 %v1851
        %v2059 = vunpack.c.l.b16 %v1852
        %v2060 = vunpack.c.l.b16 %v1853
        %v2061 = vunpack.c.h.b16 %v1853
        %v2062 = vunpack.c.l.b16 %v1854
        %v2063 = vunpack.c.h.b16 %v1854
        %v2064 = vunpack.c.l.b16 %v1855
        %v2065 = vunpack.c.h.b16 %v1855
        %v2066 = vunpack.c.l.b16 %v1856
        %v2067 = vunpack.c.l.b16 %v1857
        %v2068 = vunpack.c.h.b16 %v1857
        %v2069 = vunpack.c.l.b16 %v1858
        %v2070 = vunpack.c.h.b16 %v1858
        %v2071 = vunpack.c.l.b16 %v1859
        %v2072 = vunpack.c.h.b16 %v1859
        %v2073 = vunpack.c.l.b16 %v1860
        %v2074 = vpack.c.b16 %v1969, %v1962
        %v2075 = vpack.c.b16 %v1970, %v1963
        %v2076 = vpack.c.b16 %v1971, %v1964
        %v2077 = vpack.c.b16 %v1972, %v1965
        %v2078 = vpack.c.b16 %v1973, %v1966
        %v2079 = vpack.c.b16 %v1974, %v1967
        %v2080 = vpack.c.b16 %v1975, %v1968
        %v2081 = vpack.c.b16 %v1983, %v1976
        %v2082 = vpack.c.b16 %v1984, %v1977
        %v2083 = vpack.c.b16 %v1985, %v1978
        %v2084 = vpack.c.b16 %v1986, %v1979
        %v2085 = vpack.c.b16 %v1987, %v1980
        %v2086 = vpack.c.b16 %v1988, %v1981
        %v2087 = vpack.c.b16 %v1989, %v1982
        %v2088 = vpack.c.b16 %v1997, %v1990
        %v2089 = vpack.c.b16 %v1998, %v1991
        %v2090 = vpack.c.b16 %v1999, %v1992
        %v2091 = vpack.c.b16 %v2000, %v1993
        %v2092 = vpack.c.b16 %v2001, %v1994
        %v2093 = vpack.c.b16 %v2002, %v1995
        %v2094 = vpack.c.b16 %v2003, %v1996
        %v2095 = vpack.c.b16 %v2011, %v2004
        %v2096 = vpack.c.b16 %v2012, %v2005
        %v2097 = vpack.c.b16 %v2013, %v2006
        %v2098 = vpack.c.b16 %v2014, %v2007
        %v2099 = vpack.c.b16 %v2015, %v2008
        %v2100 = vpack.c.b16 %v2016, %v2009
        %v2101 = vpack.c.b16 %v2017, %v2010
        %v2102 = vpack.c.b16 %v2025, %v2018
        %v2103 = vpack.c.b16 %v2026, %v2019
        %v2104 = vpack.c.b16 %v2027, %v2020
        %v2105 = vpack.c.b16 %v2028, %v2021
        %v2106 = vpack.c.b16 %v2029, %v2022
        %v2107 = vpack.c.b16 %v2030, %v2023
        %v2108 = vpack.c.b16 %v2031, %v2024
        %v2109 = vpack.c.b16 %v2039, %v2032
        %v2110 = vpack.c.b16 %v2040, %v2033
        %v2111 = vpack.c.b16 %v2041, %v2034
        %v2112 = vpack.c.b16 %v2042, %v2035
        %v2113 = vpack.c.b16 %v2043, %v2036
        %v2114 = vpack.c.b16 %v2044, %v2037
        %v2115 = vpack.c.b16 %v2045, %v2038
        %v2116 = vpack.c.b16 %v2053, %v2046
        %v2117 = vpack.c.b16 %v2054, %v2047
        %v2118 = vpack.c.b16 %v2055, %v2048
        %v2119 = vpack.c.b16 %v2056, %v2049
        %v2120 = vpack.c.b16 %v2057, %v2050
        %v2121 = vpack.c.b16 %v2058, %v2051
        %v2122 = vpack.c.b16 %v2059, %v2052
        %v2123 = vpack.c.b16 %v2067, %v2060
        %v2124 = vpack.c.b16 %v2068, %v2061
        %v2125 = vpack.c.b16 %v2069, %v2062
        %v2126 = vpack.c.b16 %v2070, %v2063
        %v2127 = vpack.c.b16 %v2071, %v2064
        %v2128 = vpack.c.b16 %v2072, %v2065
        %v2129 = vpack.c.b16 %v2073, %v2066
        %2186 = vmatprep.subr.bf16.mxu0 %v2124
        %2187 = vmatpush1.bf16.msra.mxu0 %v2123
        %2188 = vmatprep.subr.bf16.mxu0 %v2117
        %2189 = vmatpush1.bf16.msra.mxu0 %v2116
        %2190 = vmatprep.subr.bf16.mxu0 %v2110
        %2191 = vmatpush1.bf16.msra.mxu0 %v2109
        %2192 = vmatprep.subr.bf16.mxu0 %v2103
        %2193 = vmatpush1.bf16.msra.mxu0 %v2102
        %2194 = vmatprep.subr.bf16.mxu0 %v2096
        %2195 = vmatpush1.bf16.msra.mxu0 %v2095
        %2196 = vmatprep.subr.bf16.mxu0 %v2089
        %2197 = vmatpush1.bf16.msra.mxu0 %v2088
        %2198 = vmatprep.subr.bf16.mxu0 %v2082
        %2199 = vmatpush1.bf16.msra.mxu0 %v2081
        %2200 = vmatprep.subr.bf16.mxu0 %v2075
        %2201 = vmatpush1.bf16.msra.mxu0 %v2074
        %2202 = vmatprep.subr.bf16.mxu0 0
        %2203 = vmatpush2.bf16.msra.mxu0 0
        %2204 = vmatprep.subr.bf16.mxu0 0
        %2205 = vmatpush2.bf16.msra.mxu0 0
        %2206 = vmatprep.subr.bf16.mxu0 0
        %2207 = vmatpush2.bf16.msra.mxu0 0
        %2208 = vmatprep.subr.bf16.mxu0 0
        %2209 = vmatpush2.bf16.msra.mxu0 0
        %2210 = vmatprep.subr.bf16.mxu0 0
        %2211 = vmatpush2.bf16.msra.mxu0 0
        %2212 = vmatprep.subr.bf16.mxu0 0
        %2213 = vmatpush2.bf16.msra.mxu0 0
        %2214 = vmatprep.subr.bf16.mxu0 0
        %2215 = vmatpush2.bf16.msra.mxu0 0
        %2216 = vmatprep.subr.bf16.mxu0 0
        %2217 = vmatpush2.bf16.msra.mxu0 0
        %2218 = vmatprep.mubr.bf16.mxu0 0
        %2219 = vmatmul.mubr.bf16.gmra.mxu0 %v1795
        %v2220 = vpop.f32.mrf.mxu0
        %v2221 = vadd.f32 %v1866, %v2220
        %v2222 = vpop.f32.mrf.mxu0
        %v2223 = vadd.f32 %v1870, %v2222
        %v2224 = vpop.f32.mrf.mxu0
        %v2225 = vadd.f32 %v1866, %v2224
        %v2226 = vpop.f32.mrf.mxu0
        %v2227 = vadd.f32 %v1870, %v2226
        %2228 = vmatprep.mubr.bf16.mxu0 0
        %2229 = vmatmul.mubr.bf16.gmra.mxu0 %v1796
        %v2230 = vpop.f32.mrf.mxu0
        %v2231 = vadd.f32 %v1866, %v2230
        %v2232 = vpop.f32.mrf.mxu0
        %v2233 = vadd.f32 %v1870, %v2232
        %v2234 = vpop.f32.mrf.mxu0
        %v2235 = vadd.f32 %v1866, %v2234
        %v2236 = vpop.f32.mrf.mxu0
        %v2237 = vadd.f32 %v1870, %v2236
        %2238 = vdwg.mxu0
        %2239 = vmatprep.subr.bf16.mxu0 %v2126
        %2240 = vmatpush1.bf16.msra.mxu0 %v2125
        %2241 = vmatprep.subr.bf16.mxu0 %v2119
        %2242 = vmatpush1.bf16.msra.mxu0 %v2118
        %2243 = vmatprep.subr.bf16.mxu0 %v2112
        %2244 = vmatpush1.bf16.msra.mxu0 %v2111
        %2245 = vmatprep.subr.bf16.mxu0 %v2105
        %2246 = vmatpush1.bf16.msra.mxu0 %v2104
        %2247 = vmatprep.subr.bf16.mxu0 %v2098
        %2248 = vmatpush1.bf16.msra.mxu0 %v2097
        %2249 = vmatprep.subr.bf16.mxu0 %v2091
        %2250 = vmatpush1.bf16.msra.mxu0 %v2090
        %2251 = vmatprep.subr.bf16.mxu0 %v2084
        %2252 = vmatpush1.bf16.msra.mxu0 %v2083
        %2253 = vmatprep.subr.bf16.mxu0 %v2077
        %2254 = vmatpush1.bf16.msra.mxu0 %v2076
        %2255 = vmatprep.subr.bf16.mxu0 0
        %2256 = vmatpush2.bf16.msra.mxu0 0
        %2257 = vmatprep.subr.bf16.mxu0 0
        %2258 = vmatpush2.bf16.msra.mxu0 0
        %2259 = vmatprep.subr.bf16.mxu0 0
        %2260 = vmatpush2.bf16.msra.mxu0 0
        %2261 = vmatprep.subr.bf16.mxu0 0
        %2262 = vmatpush2.bf16.msra.mxu0 0
        %2263 = vmatprep.subr.bf16.mxu0 0
        %2264 = vmatpush2.bf16.msra.mxu0 0
        %2265 = vmatprep.subr.bf16.mxu0 0
        %2266 = vmatpush2.bf16.msra.mxu0 0
        %2267 = vmatprep.subr.bf16.mxu0 0
        %2268 = vmatpush2.bf16.msra.mxu0 0
        %2269 = vmatprep.subr.bf16.mxu0 0
        %2270 = vmatpush2.bf16.msra.mxu0 0
        %2271 = vmatprep.mubr.bf16.mxu0 0
        %2272 = vmatmul.mubr.bf16.gmra.mxu0 %v1795
        %v2273 = vpop.f32.mrf.mxu0
        %v2274 = vadd.f32 %v1874, %v2273
        %v2275 = vpop.f32.mrf.mxu0
        %v2276 = vadd.f32 %v1878, %v2275
        %v2277 = vpop.f32.mrf.mxu0
        %v2278 = vadd.f32 %v1874, %v2277
        %v2279 = vpop.f32.mrf.mxu0
        %v2280 = vadd.f32 %v1878, %v2279
        %2281 = vmatprep.mubr.bf16.mxu0 0
        %2282 = vmatmul.mubr.bf16.gmra.mxu0 %v1796
        %v2283 = vpop.f32.mrf.mxu0
        %v2284 = vadd.f32 %v1874, %v2283
        %v2285 = vpop.f32.mrf.mxu0
        %v2286 = vadd.f32 %v1878, %v2285
        %v2287 = vpop.f32.mrf.mxu0
        %v2288 = vadd.f32 %v1874, %v2287
        %v2289 = vpop.f32.mrf.mxu0
        %v2290 = vadd.f32 %v1878, %v2289
        %2291 = vdwg.mxu0
        %2292 = vmatprep.subr.bf16.mxu0 %v2128
        %2293 = vmatpush1.bf16.msra.mxu0 %v2127
        %2294 = vmatprep.subr.bf16.mxu0 %v2121
        %2295 = vmatpush1.bf16.msra.mxu0 %v2120
        %2296 = vmatprep.subr.bf16.mxu0 %v2114
        %2297 = vmatpush1.bf16.msra.mxu0 %v2113
        %2298 = vmatprep.subr.bf16.mxu0 %v2107
        %2299 = vmatpush1.bf16.msra.mxu0 %v2106
        %2300 = vmatprep.subr.bf16.mxu0 %v2100
        %2301 = vmatpush1.bf16.msra.mxu0 %v2099
        %2302 = vmatprep.subr.bf16.mxu0 %v2093
        %2303 = vmatpush1.bf16.msra.mxu0 %v2092
        %2304 = vmatprep.subr.bf16.mxu0 %v2086
        %2305 = vmatpush1.bf16.msra.mxu0 %v2085
        %2306 = vmatprep.subr.bf16.mxu0 %v2079
        %2307 = vmatpush1.bf16.msra.mxu0 %v2078
        %2308 = vmatprep.subr.bf16.mxu0 0
        %2309 = vmatpush2.bf16.msra.mxu0 0
        %2310 = vmatprep.subr.bf16.mxu0 0
        %2311 = vmatpush2.bf16.msra.mxu0 0
        %2312 = vmatprep.subr.bf16.mxu0 0
        %2313 = vmatpush2.bf16.msra.mxu0 0
        %2314 = vmatprep.subr.bf16.mxu0 0
        %2315 = vmatpush2.bf16.msra.mxu0 0
        %2316 = vmatprep.subr.bf16.mxu0 0
        %2317 = vmatpush2.bf16.msra.mxu0 0
        %2318 = vmatprep.subr.bf16.mxu0 0
        %2319 = vmatpush2.bf16.msra.mxu0 0
        %2320 = vmatprep.subr.bf16.mxu0 0
        %2321 = vmatpush2.bf16.msra.mxu0 0
        %2322 = vmatprep.subr.bf16.mxu0 0
        %2323 = vmatpush2.bf16.msra.mxu0 0
        %2324 = vmatprep.mubr.bf16.mxu0 0
        %2325 = vmatmul.mubr.bf16.gmra.mxu0 %v1795
        %v2326 = vpop.f32.mrf.mxu0
        %v2327 = vadd.f32 %v1882, %v2326
        %v2328 = vpop.f32.mrf.mxu0
        %v2329 = vadd.f32 %v1886, %v2328
        %v2330 = vpop.f32.mrf.mxu0
        %v2331 = vadd.f32 %v1882, %v2330
        %v2332 = vpop.f32.mrf.mxu0
        %v2333 = vadd.f32 %v1886, %v2332
        %2334 = vmatprep.mubr.bf16.mxu0 0
        %2335 = vmatmul.mubr.bf16.gmra.mxu0 %v1796
        %v2336 = vpop.f32.mrf.mxu0
        %v2337 = vadd.f32 %v1882, %v2336
        %v2338 = vpop.f32.mrf.mxu0
        %v2339 = vadd.f32 %v1886, %v2338
        %v2340 = vpop.f32.mrf.mxu0
        %v2341 = vadd.f32 %v1882, %v2340
        %v2342 = vpop.f32.mrf.mxu0
        %v2343 = vadd.f32 %v1886, %v2342
        %2344 = vdwg.mxu0
        %2345 = vmatprep.subr.bf16.mxu0 0
        %2346 = vmatpush1.bf16.msra.mxu0 %v2129
        %2347 = vmatprep.subr.bf16.mxu0 0
        %2348 = vmatpush1.bf16.msra.mxu0 %v2122
        %2349 = vmatprep.subr.bf16.mxu0 0
        %2350 = vmatpush1.bf16.msra.mxu0 %v2115
        %2351 = vmatprep.subr.bf16.mxu0 0
        %2352 = vmatpush1.bf16.msra.mxu0 %v2108
        %2353 = vmatprep.subr.bf16.mxu0 0
        %2354 = vmatpush1.bf16.msra.mxu0 %v2101
        %2355 = vmatprep.subr.bf16.mxu0 0
        %2356 = vmatpush1.bf16.msra.mxu0 %v2094
        %2357 = vmatprep.subr.bf16.mxu0 0
        %2358 = vmatpush1.bf16.msra.mxu0 %v2087
        %2359 = vmatprep.subr.bf16.mxu0 0
        %2360 = vmatpush1.bf16.msra.mxu0 %v2080
        %2361 = vmatprep.subr.bf16.mxu0 0
        %2362 = vmatpush2.bf16.msra.mxu0 0
        %2363 = vmatprep.subr.bf16.mxu0 0
        %2364 = vmatpush2.bf16.msra.mxu0 0
        %2365 = vmatprep.subr.bf16.mxu0 0
        %2366 = vmatpush2.bf16.msra.mxu0 0
        %2367 = vmatprep.subr.bf16.mxu0 0
        %2368 = vmatpush2.bf16.msra.mxu0 0
        %2369 = vmatprep.subr.bf16.mxu0 0
        %2370 = vmatpush2.bf16.msra.mxu0 0
        %2371 = vmatprep.subr.bf16.mxu0 0
        %2372 = vmatpush2.bf16.msra.mxu0 0
        %2373 = vmatprep.subr.bf16.mxu0 0
        %2374 = vmatpush2.bf16.msra.mxu0 0
        %2375 = vmatprep.subr.bf16.mxu0 0
        %2376 = vmatpush2.bf16.msra.mxu0 0
        %2377 = vmatprep.mubr.bf16.mxu0 0
        %2378 = vmatmul.mubr.bf16.gmra.mxu0 %v1795
        %v2379 = vpop.f32.mrf.mxu0
        %v2380 = vadd.f32 %v1890, %v2379
        %v2381 = vpop.f32.mrf.mxu0
        %v2382 = vpop.f32.mrf.mxu0
        %v2383 = vadd.f32 %v1890, %v2382
        %v2384 = vpop.f32.mrf.mxu0
        %2385 = vmatprep.mubr.bf16.mxu0 0
        %2386 = vmatmul.mubr.bf16.gmra.mxu0 %v1796
        %v2387 = vpop.f32.mrf.mxu0
        %v2388 = vadd.f32 %v1890, %v2387
        %v2389 = vpop.f32.mrf.mxu0
        %v2390 = vpop.f32.mrf.mxu0
        %v2391 = vadd.f32 %v1890, %v2390
        %v2392 = vpop.f32.mrf.mxu0
        %2393 = vdwg.mxu0
        %v2394 = vpack.c.bf16 %v2225, %v2221
        %v2395 = vpack.c.bf16 %v2227, %v2223
        %v2396 = vpack.c.bf16 %v2278, %v2274
        %v2397 = vpack.c.bf16 %v2280, %v2276
        %v2398 = vpack.c.bf16 %v2331, %v2327
        %v2399 = vpack.c.bf16 %v2333, %v2329
        %v2400 = vpack.c.bf16 %v2383, %v2380
        %v2401 = vpack.c.bf16 %v2235, %v2231
        %v2402 = vpack.c.bf16 %v2237, %v2233
        %v2403 = vpack.c.bf16 %v2288, %v2284
        %v2404 = vpack.c.bf16 %v2290, %v2286
        %v2405 = vpack.c.bf16 %v2341, %v2337
        %v2406 = vpack.c.bf16 %v2343, %v2339
        %v2407 = vpack.c.bf16 %v2391, %v2388
        %v2408 = vmul.bf16 %v2394, 1056980736
        %v2409 = vmul.bf16 %v2395, 1056980736
        %v2410 = vmul.bf16 %v2396, 1056980736
        %v2411 = vmul.bf16 %v2397, 1056980736
        %v2412 = vmul.bf16 %v2398, 1056980736
        %v2413 = vmul.bf16 %v2399, 1056980736
        %v2414 = vmul.bf16 %v2400, 1056980736
        %v2415 = vmul.bf16 %v2401, 1056980736
        %v2416 = vmul.bf16 %v2402, 1056980736
        %v2417 = vmul.bf16 %v2403, 1056980736
        %v2418 = vmul.bf16 %v2404, 1056980736
        %v2419 = vmul.bf16 %v2405, 1056980736
        %v2420 = vmul.bf16 %v2406, 1056980736
        %v2421 = vmul.bf16 %v2407, 1056980736
        %v2422 = vtanh.bf16.pop %v2408
        %v2423 = vtanh.bf16.pop %v2409
        %v2424 = vtanh.bf16.pop %v2410
        %v2425 = vtanh.bf16.pop %v2411
        %v2426 = vtanh.bf16.pop %v2412
        %v2427 = vtanh.bf16.pop %v2413
        %v2428 = vtanh.bf16.pop %v2414
        %v2429 = vtanh.bf16.pop %v2415
        %v2430 = vtanh.bf16.pop %v2416
        %v2431 = vtanh.bf16.pop %v2417
        %v2432 = vtanh.bf16.pop %v2418
        %v2433 = vtanh.bf16.pop %v2419
        %v2434 = vtanh.bf16.pop %v2420
        %v2435 = vtanh.bf16.pop %v2421
        %v2436 = vadd.bf16 %v2422, 1065369472
        %v2437 = vadd.bf16 %v2423, 1065369472
        %v2438 = vadd.bf16 %v2424, 1065369472
        %v2439 = vadd.bf16 %v2425, 1065369472
        %v2440 = vadd.bf16 %v2426, 1065369472
        %v2441 = vadd.bf16 %v2427, 1065369472
        %v2442 = vadd.bf16 %v2428, 1065369472
        %v2443 = vadd.bf16 %v2429, 1065369472
        %v2444 = vadd.bf16 %v2430, 1065369472
        %v2445 = vadd.bf16 %v2431, 1065369472
        %v2446 = vadd.bf16 %v2432, 1065369472
        %v2447 = vadd.bf16 %v2433, 1065369472
        %v2448 = vadd.bf16 %v2434, 1065369472
        %v2449 = vadd.bf16 %v2435, 1065369472
        %v2450 = vmul.bf16 %v2436, 1056980736
        %v2451 = vmul.bf16 %v2437, 1056980736
        %v2452 = vmul.bf16 %v2438, 1056980736
        %v2453 = vmul.bf16 %v2439, 1056980736
        %v2454 = vmul.bf16 %v2440, 1056980736
        %v2455 = vmul.bf16 %v2441, 1056980736
        %v2456 = vmul.bf16 %v2442, 1056980736
        %v2457 = vmul.bf16 %v2443, 1056980736
        %v2458 = vmul.bf16 %v2444, 1056980736
        %v2459 = vmul.bf16 %v2445, 1056980736
        %v2460 = vmul.bf16 %v2446, 1056980736
        %v2461 = vmul.bf16 %v2447, 1056980736
        %v2462 = vmul.bf16 %v2448, 1056980736
        %v2463 = vmul.bf16 %v2449, 1056980736
        %v2478 = vunpack.c.l.b16 %v2450
        %v2479 = vunpack.c.l.b16 %v2451
        %v2480 = vunpack.c.l.b16 %v2452
        %v2481 = vunpack.c.l.b16 %v2453
        %v2482 = vunpack.c.l.b16 %v2454
        %v2483 = vunpack.c.l.b16 %v2455
        %v2484 = vunpack.c.l.b16 %v2456
        %v2485 = vunpack.c.h.b16 %v2450
        %v2486 = vunpack.c.h.b16 %v2451
        %v2487 = vunpack.c.h.b16 %v2452
        %v2488 = vunpack.c.h.b16 %v2453
        %v2489 = vunpack.c.h.b16 %v2454
        %v2490 = vunpack.c.h.b16 %v2455
        %v2491 = vunpack.c.h.b16 %v2456
        %v2492 = vunpack.c.l.b16 %v2457
        %v2493 = vunpack.c.l.b16 %v2458
        %v2494 = vunpack.c.l.b16 %v2459
        %v2495 = vunpack.c.l.b16 %v2460
        %v2496 = vunpack.c.l.b16 %v2461
        %v2497 = vunpack.c.l.b16 %v2462
        %v2498 = vunpack.c.l.b16 %v2463
        %v2499 = vunpack.c.h.b16 %v2457
        %v2500 = vunpack.c.h.b16 %v2458
        %v2501 = vunpack.c.h.b16 %v2459
        %v2502 = vunpack.c.h.b16 %v2460
        %v2503 = vunpack.c.h.b16 %v2461
        %v2504 = vunpack.c.h.b16 %v2462
        %v2505 = vunpack.c.h.b16 %v2463
        %v2506 = vpack.c.b16 %v2479, %v2478
        %v2507 = vpack.c.b16 %v2481, %v2480
        %v2508 = vpack.c.b16 %v2483, %v2482
        %v2509 = vpack.c.b16 %v2484, %v2484
        %v2510 = vpack.c.b16 %v2486, %v2485
        %v2511 = vpack.c.b16 %v2488, %v2487
        %v2512 = vpack.c.b16 %v2490, %v2489
        %v2513 = vpack.c.b16 %v2491, %v2491
        %v2514 = vpack.c.b16 %v2493, %v2492
        %v2515 = vpack.c.b16 %v2495, %v2494
        %v2516 = vpack.c.b16 %v2497, %v2496
        %v2517 = vpack.c.b16 %v2498, %v2498
        %v2518 = vpack.c.b16 %v2500, %v2499
        %v2519 = vpack.c.b16 %v2502, %v2501
        %v2520 = vpack.c.b16 %v2504, %v2503
        %v2521 = vpack.c.b16 %v2505, %v2505
        %2538 = vst [vmem:[%s579] sm:$0xff] %v2506
        %2539 = vst [vmem:[%s579 + $0x8] sm:$0xff] %v2507
        %2540 = vst [vmem:[%s579 + $0x10] sm:$0xff] %v2508
        %vm2541 = vcmask 125952
        %2542 = vst.msk [vmem:[%s579 + $0x18] sm:$0xf] %vm2541, %v2509
        %2543 = vst [vmem:[%s579 + $0x1c] sm:$0xff] %v2510
        %2544 = vst [vmem:[%s579 + $0x24] sm:$0xff] %v2511
        %2545 = vst [vmem:[%s579 + $0x2c] sm:$0xff] %v2512
        %2546 = vst.msk [vmem:[%s579 + $0x34] sm:$0xf] %vm2541, %v2513
        %2547 = vst [vmem:[%s579 + $0x38] sm:$0xff] %v2514
        %2548 = vst [vmem:[%s579 + $0x40] sm:$0xff] %v2515
        %2549 = vst [vmem:[%s579 + $0x48] sm:$0xff] %v2516
        %2550 = vst.msk [vmem:[%s579 + $0x50] sm:$0xf] %vm2541, %v2517
        %2551 = vst [vmem:[%s579 + $0x54] sm:$0xff] %v2518
        %2552 = vst [vmem:[%s579 + $0x5c] sm:$0xff] %v2519
        %2553 = vst [vmem:[%s579 + $0x64] sm:$0xff] %v2520
        %2554 = vst.msk [vmem:[%s579 + $0x6c] sm:$0xf] %vm2541, %v2521
        %s2555 = smul.u32 4, %s33
        %p2556 = scmp.lt.s32.totalorder %s2555, 7
        %s2557 = scalar_select %p2556, %s2555, 7
        %s2558 = smul.addr %s2557, 8
        %s2559 = scalar_lea.vmem %s17, %s2558
        %s2560 = sand.u32 %s429, 1
        %s2561 = scalar_lea.sflag [#allocation3], %s2560
        %s2562 = sand.u32 %s429, 1
        %s2563 = smul.addr %s2562, 112
        %s2564 = scalar_lea.vmem [#allocation2], %s2563
        // Predicated region
        $region89: #{tpu_custom_call.1} parent=87 // pred_check
          %p2565 = pneg %p413
        $region90: #{tpu_custom_call.1} parent=87 // pred_check_branch
          %2567 = sbr.rel (%p2565) target = $region92
        $region91: #{tpu_custom_call.1} parent=87 // pred_region
          %s2568 = smul.u32 4, %s33
        $region92: #{tpu_custom_call.1} parent=87 // pred_fallthru
          _
        // Predicated region
        $region93: #{tpu_custom_call.1} parent=87 // pred_check
          %p2569 = pneg %p439
        $region94: #{tpu_custom_call.1} parent=87 // pred_check_branch
          %2571 = sbr.rel (%p2569) target = $region96
        $region95: #{tpu_custom_call.1} parent=87 // pred_region
          %s2572 = smul.u32 4, %s33
          %s2574 = ssub.s32 1792, 1792
          %2575 = vsyncadd %s2561, %s2574
          %s2576 = smul.addr %s2572, 7
          %s2577 = smul.addr %s2576, 64
          %s2578 = scalar_lea.hbm %s18, %s2577
          %s2579 = sshll.u32 %s2564, 4
          %s2580 = int_to_ptr.vmem [resolvable:$true] %s2579
          %2585 = dma.vmem_to_hbm [thread:$0]  %s2580, 1792, %s2578, %s2561, 448, 448, 28
        $region96: #{tpu_custom_call.1} parent=87 // pred_fallthru
          _
      $region88: #{tpu_custom_call.1} parent=5 // pred_fallthru
        _
      %p2586 = scmp.le.s32.totalorder 2, %s28
      // Predicated region
      $region97: #{tpu_custom_call.1} parent=5 // pred_check
        %p2587 = pneg %p2586
      $region98: #{tpu_custom_call.1} parent=5 // pred_check_branch
        %2589 = sbr.rel (%p2587) target = $region100
      $region99: #{tpu_custom_call.1} parent=5 // pred_region
        %s2590 = ssub.s32 %s28, 2
        // Predicated region
        $region101: #{tpu_custom_call.1} parent=99 // pred_check
          %p2591 = pneg %p419
        $region102: #{tpu_custom_call.1} parent=99 // pred_check_branch
          %2593 = sbr.rel (%p2591) target = $region104
        $region103: #{tpu_custom_call.1} parent=99 // pred_region
          %s2594 = smul.u32 4, %s34
          %p2595 = scmp.lt.s32.totalorder %s2594, 7
          %s2596 = scalar_select %p2595, %s2594, 7
          %s2597 = smul.addr %s2596, 8
          %s2598 = scalar_lea.vmem %s17, %s2597
        $region104: #{tpu_custom_call.1} parent=99 // pred_fallthru
          _
        // Predicated region
        $region105: #{tpu_custom_call.1} parent=99 // pred_check
          %p2599 = pneg %p445
        $region106: #{tpu_custom_call.1} parent=99 // pred_check_branch
          %2601 = sbr.rel (%p2599) target = $region108
        $region107: #{tpu_custom_call.1} parent=99 // pred_region
          %s2602 = sand.u32 %s430, 1
          %s2603 = scalar_lea.sflag [#allocation3], %s2602
          %s2604 = sand.u32 %s430, 1
          %s2605 = smul.addr %s2604, 112
          %s2606 = scalar_lea.vmem [#allocation2], %s2605
          %2607 = dma.done %s2603, 1792
        $region108: #{tpu_custom_call.1} parent=99 // pred_fallthru
          _
      $region100: #{tpu_custom_call.1} parent=5 // pred_fallthru
        _
    $region6: #{tpu_custom_call.1} parent=1 // loop_footer
      %s32 = sadd.s32 1, %s28
    $region7: #{tpu_custom_call.1} parent=1 // loop_footer_branch
      %27 = sbr.rel target = $region3
    $region8: #{tpu_custom_call.1} parent=1 // loop_exit
      _
    %2608 = vsyncpa [#allocation3], 1
    %s2609 = scalar_lea.sflag [#allocation3], 1
    %2610 = vsyncpa %s2609, 1

</llo_original>
